<compile_context>
chip_gen: v5e
topology: v5e:2x2
jax: 0.10.0
libtpu: 0.0.40
codegen_flags: <defaults>
</compile_context>

<pallas_src>
import functools
import numpy as np

import jax
import jax.numpy as jnp
from jax.experimental import pallas as pl
from jax.experimental.pallas import tpu as pltpu


# ----------------------------------------------------------------------------
# Helpers
# ----------------------------------------------------------------------------
def _mxu_bf16(a, b):
    """MXU matmul with bf16 operands and f32 accumulation (big projections)."""
    return jnp.dot(a.astype(jnp.bfloat16), b.astype(jnp.bfloat16),
                   preferred_element_type=jnp.float32)


def _dot_f32(a, b):
    """Tiny f32 matmul (tail linears / per-row attention dots)."""
    return jnp.dot(a, b, preferred_element_type=jnp.float32)


def _elu(x):
    return jnp.where(x > 0.0, x, jnp.exp(jnp.minimum(x, 0.0)) - 1.0)


def _pick_tile(dim, target, align):
    """Largest multiple of `align` <= target that divides `dim`, else full dim."""
    t = min(target, dim)
    t -= t % align
    while t >= align:
        if dim % t == 0:
            return t
        t -= align
    return dim


# ----------------------------------------------------------------------------
# Kernel 1: slice-feature extractor (surrogate) — K-tiled Linear + ReLU
# ----------------------------------------------------------------------------
def _slice_linear_kernel(x_ref, w_ref, b_ref, o_ref):
    k = pl.program_id(1)

    @pl.when(k == 0)
    def _():
        o_ref[...] = jnp.zeros_like(o_ref)

    # bf16 operands straight from HBM (stored at rest); accumulate in f32
    # directly into the K-resident output block (no separate acc scratch).
    o_ref[...] += jnp.dot(x_ref[...], w_ref[...],
                          preferred_element_type=jnp.float32)

    @pl.when(k == pl.num_programs(1) - 1)
    def _():
        o_ref[...] = jnp.maximum(o_ref[...] + b_ref[...], 0.0)


def slice_linear(x, w, b, *, tm=256, tk=512):
    """ReLU(x @ w + b).  x:(M,K) bf16, w:(K,N) bf16, b:(1,N) f32 -> (M,N) f32."""
    M, K = x.shape
    N = w.shape[1]
    tm = _pick_tile(M, tm, 8)       # keep M//tm >= 2 when M allows (v7x 2 TCs)
    tk = _pick_tile(K, tk, 128)     # fat K tiles amortize per-step overhead
    m_steps, k_steps = M // tm, K // tk

    x_spec = pl.BlockSpec((tm, tk), lambda i, k: (i, k))
    if k_steps >= 3:
        # deeper input pipelining on the mem-bound K stream
        x_spec = pl.BlockSpec((tm, tk), lambda i, k: (i, k),
                              pipeline_mode=pl.Buffered(3))

    x_bufs = 3 if k_steps >= 3 else 2
    vmem_bytes = (x_bufs * tm * tk * x.dtype.itemsize
                  + 2 * tk * N * w.dtype.itemsize
                  + 2 * tm * N * 4
                  + 2 * N * 4)
    # explicit budget with 2x headroom; capped below v7x's 32 MiB scoped default
    vmem_limit = int(min(max(2 * vmem_bytes, 4 << 20), 30 << 20))

    return pl.pallas_call(
        _slice_linear_kernel,
        grid=(m_steps, k_steps),
        out_shape=jax.ShapeDtypeStruct((M, N), jnp.float32),
        in_specs=[
            x_spec,
            pl.BlockSpec((tk, N), lambda i, k: (k, 0)),
            pl.BlockSpec((1, N), lambda i, k: (0, 0)),
        ],
        out_specs=pl.BlockSpec((tm, N), lambda i, k: (i, 0)),
        compiler_params=pltpu.CompilerParams(
            dimension_semantics=("parallel", "arbitrary"),
            vmem_limit_bytes=vmem_limit),
    )(x, w, b)


# ----------------------------------------------------------------------------
# Kernel 2: fused graph path, one BATCH CHUNK per grid step
# ----------------------------------------------------------------------------
def _graph_kernel(sf_ref, st_ref, bias_ref, w1_ref, a1_ref, a2_ref, w2_ref,
                  oa1_ref, oa2_ref, llw_ref, llb_ref, fcw_ref, fcb_ref,
                  sfcw_ref, sfcb_ref, packed_ref, att_ref,
                  *, bb, mid_nodes, n_img, n_struct, nheads, nhid, emb,
                  alpha, packed_width, att_pad):
    n_nodes = mid_nodes + n_img + n_struct

    bias = bias_ref[...]                   # (N, N) additive adjacency mask
    sf = sf_ref[...]                       # (bb, C, emb) f32 slice features
    st = st_ref[...]                       # (bb, n_struct, emb) f32

    # --- assemble node features for the whole chunk in VMEM ----------------
    # (zero mid rows never touch HBM; chunk folded into the MXU M dimension)
    rows = []
    for bi in range(bb):
        rows.append(jnp.zeros((mid_nodes, emb), jnp.float32))
        rows.append(sf[bi])
        rows.append(st[bi])
    x2 = jnp.concatenate(rows, axis=0)                     # (bb*N, emb)

    # --- layer-1 projection: single chunk-folded MXU matmul ----------------
    wh1_all = _mxu_bf16(x2, w1_ref[...])                   # (bb*N, nheads*nhid)

    def masked_softmax(e):
        e = e + bias                                       # hoisted adj mask
        e = e - jnp.max(e, axis=-1, keepdims=True)         # stable softmax
        p = jnp.exp(e)
        return p / jnp.sum(p, axis=-1, keepdims=True)      # exact reciprocal

    def attention_head(wh, a1h, a2h):
        # e_ij = LeakyReLU(Wh_i . a1 + Wh_j . a2); masked softmax over j.
        e_src = jnp.sum(wh * a1h, axis=-1, keepdims=True)  # (N, 1)   VPU
        e_dst = jax.lax.dot_general(a2h, wh, (((1,), (1,)), ((), ())),
                                    preferred_element_type=jnp.float32)  # (1,N)
        e = e_src + e_dst
        e = jnp.where(e > 0.0, e, alpha * e)               # LeakyReLU(alpha)
        att = masked_softmax(e)                            # (N, N)
        hp = _dot_f32(att, wh)                             # (N, fout)
        return hp, att

    a1 = a1_ref[...]                                       # (nheads, nhid)
    a2 = a2_ref[...]

    x_cat_rows = []
    for bi in range(bb):                                   # static unroll
        wh_b = wh1_all[bi * n_nodes:(bi + 1) * n_nodes, :]
        head_outs = []
        att_sum = jnp.zeros((n_nodes, n_nodes), jnp.float32)
        for h in range(nheads):                            # static unroll
            hp, att = attention_head(wh_b[:, h * nhid:(h + 1) * nhid],
                                     a1[h:h + 1, :], a2[h:h + 1, :])
            head_outs.append(_elu(hp))                     # concat=True -> ELU
            att_sum = att_sum + att
        x_cat_rows.append(head_outs[0] if nheads == 1
                          else jnp.concatenate(head_outs, axis=-1))
        att_mean = att_sum * (1.0 / nheads)
        if att_pad > n_nodes:                              # lane-dense store
            att_mean = jnp.concatenate(
                [att_mean,
                 jnp.zeros((n_nodes, att_pad - n_nodes), jnp.float32)], axis=-1)
        att_ref[bi] = att_mean

    # --- layer-2 projection: chunk-folded MXU matmul ------------------------
    x_cat_all = jnp.concatenate(x_cat_rows, axis=0)        # (bb*N, nh*nhid)
    wh2_all = _mxu_bf16(x_cat_all, w2_ref[...])            # (bb*N, emb)

    oa1 = oa1_ref[...]
    oa2 = oa2_ref[...]
    packed_rows = []
    for bi in range(bb):
        wh2_b = wh2_all[bi * n_nodes:(bi + 1) * n_nodes, :]
        img_feat, _ = attention_head(wh2_b, oa1, oa2)      # concat=False: no ELU
        img_feat = _elu(img_feat)                          # outer F.elu
        node0 = img_feat[0:1, :]                           # (1, emb)
        feature = jnp.maximum(_dot_f32(node0, llw_ref[...]) + llb_ref[...], 0.0)
        fc_out = _dot_f32(feature, fcw_ref[...]) + fcb_ref[...]        # (1, 2)
        # channel mean over the aligned per-element slice block
        slices_hidden = jnp.mean(sf[bi], axis=0, keepdims=True)        # (1, emb)
        sfc_out = _dot_f32(slices_hidden, sfcw_ref[...]) + sfcb_ref[...]  # (1,2)

        pieces = [slices_hidden, feature, fc_out, sfc_out]
        pad = packed_width - (3 * emb + 4)
        if pad:
            pieces.append(jnp.zeros((1, pad), jnp.float32))
        packed_rows.append(jnp.concatenate(pieces, axis=-1))
    # single lane-dense store for the whole chunk
    packed_ref[...] = jnp.concatenate(packed_rows, axis=0)  # (bb, packed_width)


def fused_graph(slice_feats, struct_feas, adj_bias, params, *, mid_nodes,
                nheads, nhid, emb, alpha):
    B, C, _ = slice_feats.shape
    n_struct = struct_feas.shape[1]
    n_nodes = mid_nodes + C + n_struct
    bb = 8 if B % 8 == 0 else B            # batch chunk per grid step
    packed_width = ((3 * emb + 4 + 127) // 128) * 128
    att_pad = ((n_nodes + 127) // 128) * 128

    # fold the per-head projection weights into one (F_in, nheads*nhid) matrix
    w1 = jnp.transpose(params["att_W"], (1, 0, 2)).reshape(emb, nheads * nhid)
    w2 = params["out_W"][0]

    kernel = functools.partial(
        _graph_kernel, bb=bb, mid_nodes=mid_nodes, n_img=C, n_struct=n_struct,
        nheads=nheads, nhid=nhid, emb=emb, alpha=alpha,
        packed_width=packed_width, att_pad=att_pad)

    def full(shape):
        return pl.BlockSpec(shape, lambda *_: (0,) * len(shape))

    packed, att = pl.pallas_call(
        kernel,
        grid=(B // bb,),
        out_shape=(jax.ShapeDtypeStruct((B, packed_width), jnp.float32),
                   jax.ShapeDtypeStruct((B, n_nodes, att_pad), jnp.float32)),
        in_specs=[
            pl.BlockSpec((bb, C, emb), lambda g: (g, 0, 0)),
            pl.BlockSpec((bb, n_struct, emb), lambda g: (g, 0, 0)),
            full((n_nodes, n_nodes)),
            full((emb, nheads * nhid)),
            full((nheads, nhid)),
            full((nheads, nhid)),
            full((nheads * nhid, emb)),
            full((1, emb)),
            full((1, emb)),
            full((emb, 2 * emb)),
            full((1, 2 * emb)),
            full((2 * emb, 2)),
            full((1, 2)),
            full((emb, 2)),
            full((1, 2)),
        ],
        out_specs=(pl.BlockSpec((bb, packed_width), lambda g: (g, 0)),
                   pl.BlockSpec((bb, n_nodes, att_pad), lambda g: (g, 0, 0))),
        compiler_params=pltpu.CompilerParams(
            dimension_semantics=("parallel",)),
    )(slice_feats, struct_feas, adj_bias, w1,
      params["att_a1"], params["att_a2"], w2,
      params["out_a1"], params["out_a2"],
      params["ll_w"], params["ll_b"], params["fc_w"], params["fc_b"],
      params["sfc_w"], params["sfc_b"])
    return packed, att[:, :, :n_nodes]


# ----------------------------------------------------------------------------
# Static adjacency construction (host-side numpy) — ports get_adj + normalize
# ----------------------------------------------------------------------------
def get_adj_np(all_num, struct_num, mid_nodes):
    N = all_num - struct_num
    if mid_nodes > 0:
        mid = (N - mid_nodes) // 2 + mid_nodes - 1
        width = (N - mid_nodes) // mid_nodes // 2
        width_list = [width * (i + 1) for i in range(mid_nodes)]
    adj = []
    for i in range(mid_nodes):
        row = []
        for j in range(all_num):
            if i == mid_nodes - 1:
                row.append(1 if j > mid_nodes - 1 else 0)
            elif (j == i + 1
                  or (j > mid - width_list[i] and j < mid + width_list[i])
                  or j >= N):
                row.append(1)
            else:
                row.append(0)
        adj.append(row)
    for i in range(mid_nodes, all_num):
        row = []
        for j in range(all_num):
            if i == mid_nodes:
                row.append(1 if j == mid_nodes + 1 else 0)
            elif i == N - 1:
                row.append(1 if j == N - 2 else 0)
            elif i >= N:
                row.append(1 if j >= N else 0)
            elif j == i - 1 or j == i + 1:
                row.append(1)
            else:
                row.append(0)
        adj.append(row)
    A = np.asarray(adj, dtype=np.float64) + np.eye(all_num)
    rowsum = A.sum(1)
    r_inv = np.power(rowsum, -1.0)
    r_inv[np.isinf(r_inv)] = 0.0
    A = np.diag(r_inv) @ A            # row-normalize (sparse `normalize` port)
    return A.astype(np.float32)


# ----------------------------------------------------------------------------
# Parameters & full forward
# ----------------------------------------------------------------------------
STRUCT_VOCABS = [4, 5, 5, 5, 5, 3, 4, 4, 50]


def init_params(key, emb, nfeat, nhid, nheads, flat_hw):
    ks = jax.random.split(key, 12)

    def dense(k, shape, scale=0.1):
        return jax.random.normal(k, shape, jnp.float32) * scale

    emb_keys = jax.random.split(ks[1], len(STRUCT_VOCABS))
    return {
        # surrogate SliceEmbeddingImagenet: Linear(H*W -> emb) + ReLU
        # bf16 at rest: halves HBM traffic on the mem-bound slice matmul
        "slice_w": dense(ks[0], (flat_hw, emb)).astype(jnp.bfloat16),
        "slice_b": jnp.zeros((1, emb), jnp.float32),
        # nn.Embedding tables
        "struct_emb": [dense(emb_keys[i], (v, emb))
                       for i, v in enumerate(STRUCT_VOCABS)],
        # nheads GraphAttentionLayer(nfeat, nhid)
        "att_W": dense(ks[2], (nheads, nfeat, nhid)),
        "att_a1": dense(ks[3], (nheads, nhid)),
        "att_a2": dense(ks[4], (nheads, nhid)),
        # out_att1: GraphAttentionLayer(nhid*nheads, emb), concat=False
        "out_W": dense(ks[5], (1, nhid * nheads, emb)),
        "out_a1": dense(ks[6], (1, emb)),
        "out_a2": dense(ks[7], (1, emb)),
        # layer_last: Linear(emb, 2*emb) + ReLU (+ Dropout eval=id)
        "ll_w": dense(ks[8], (emb, 2 * emb)),
        "ll_b": jnp.zeros((1, 2 * emb), jnp.float32),
        # fc: Linear(2*emb, 2)
        "fc_w": dense(ks[9], (2 * emb, 2)),
        "fc_b": jnp.zeros((1, 2), jnp.float32),
        # slice_fc: Linear(emb, 2)
        "sfc_w": dense(ks[10], (emb, 2)),
        "sfc_b": jnp.zeros((1, 2), jnp.float32),
    }


def gat_embedding_forward(params, input_img, input_struct, *, mid_nodes, emb,
                          nhid, nheads, alpha):
    B, C, H, W = input_img.shape

    # --- per-channel slice features (surrogate SliceEmbeddingImagenet) ------
    # bf16 image operand: the slice matmul is HBM-bound, so halve its bytes.
    x2d = input_img.reshape(B * C, H * W).astype(jnp.bfloat16)
    slice_feats = slice_linear(x2d, params["slice_w"], params["slice_b"])
    slice_feats = slice_feats.reshape(B, C, emb)                     # (B, C, emb)

    # --- structural embeddings (gather — plain XLA, no Pallas equivalent) ---
    struct_feas = jnp.stack(
        [jnp.take(params["struct_emb"][i], input_struct[:, i], axis=0)
         for i in range(input_struct.shape[1])], axis=1)             # (B, 9, emb)

    all_num = mid_nodes + C + struct_feas.shape[1]
    adj = get_adj_np(all_num, struct_feas.shape[1], mid_nodes)
    # GAT layers use adj only as a >0 mask; hoist it to an additive bias
    adj_bias = jnp.asarray(np.where(adj > 0, 0.0, -9e15), jnp.float32)

    # F.dropout(..., training=False) -> identity.  Node features are passed
    # as separate slice/struct tensors; the (B, N, emb) concat is assembled
    # inside the graph kernel in VMEM (no HBM round trip).
    packed, batch_attention = fused_graph(
        slice_feats, struct_feas, adj_bias, params, mid_nodes=mid_nodes,
        nheads=nheads, nhid=nhid, emb=emb, alpha=alpha)

    slices_hidden = packed[:, :emb]                                   # (B, emb)
    feature = packed[:, emb:3 * emb]                                  # (B, 2*emb)
    fc_out = packed[:, 3 * emb:3 * emb + 2]                           # (B, 2)
    slices_out = packed[:, 3 * emb + 2:3 * emb + 4]                   # (B, 2)
    return slices_hidden, feature, fc_out, slices_out, batch_attention


# ----------------------------------------------------------------------------
if __name__ == "__main__":
    mid_nodes = 2
    emb_size = 32
    nfeat = emb_size        # node features entering the GAT are emb_size wide
    nhid = 16
    nheads = 2
    alpha = 0.2
    B, C, H, W = 2, 4, 16, 16

    key = jax.random.PRNGKey(0)
    k_img, k_struct, k_par = jax.random.split(key, 3)

    input_img = jax.random.normal(k_img, (B, C, H, W), jnp.float32)
    vocabs = jnp.array(STRUCT_VOCABS, jnp.int32)
    input_struct = (jax.random.randint(k_struct, (B, len(STRUCT_VOCABS)),
                                       0, 10000, jnp.int32) % vocabs[None, :])

    params = init_params(k_par, emb_size, nfeat, nhid, nheads, H * W)

    fwd = jax.jit(functools.partial(
        gat_embedding_forward, mid_nodes=mid_nodes, emb=emb_size,
        nhid=nhid, nheads=nheads, alpha=alpha))

    outs = fwd(params, input_img, input_struct)
    jax.block_until_ready(outs)

    slices_hidden, feature, fc_out, slices_out, batch_attention = outs
    N_all = mid_nodes + C + len(STRUCT_VOCABS)
    assert slices_hidden.shape == (B, emb_size)
    assert feature.shape == (B, 2 * emb_size)
    assert fc_out.shape == (B, 2)
    assert slices_out.shape == (B, 2)
    assert batch_attention.shape == (B, N_all, N_all)
    # attention rows over valid nodes should sum to ~1 (exact reciprocal used)
    row_sums = jnp.sum(batch_attention, axis=-1)
    assert bool(jnp.all(jnp.abs(row_sums - 1.0) < 1e-3))
    assert all(bool(jnp.all(jnp.isfinite(o))) for o in outs)

    print("KERNEL_OK")
</pallas_src>

<mosaic_0001>
module attributes {stable_mosaic.version = 11 : i64} {
  func.func @_slice_linear_kernel(%arg0: i32, %arg1: i32, %arg2: memref<8x256xbf16, #tpu.memory_space<vmem>>, %arg3: memref<256x32xbf16, #tpu.memory_space<vmem>>, %arg4: memref<1x32xf32, #tpu.memory_space<vmem>>, %arg5: memref<8x32xf32, #tpu.memory_space<vmem>>) attributes {dimension_semantics = [#tpu.dimension_semantics<parallel>, #tpu.dimension_semantics<arbitrary>], iteration_bounds = array<i64: 1, 1>, scalar_prefetch = 0 : i64, scratch_operands = 0 : i64, tpu.core_type = #tpu.core_type<tc>, window_params = [{transform_indices = @transform_0, window_bounds = array<i64: 8, 256>}, {transform_indices = @transform_1, window_bounds = array<i64: 256, 32>}, {pipeline_mode = #tpu.pipeline_mode<synchronous>, transform_indices = @transform_2, window_bounds = array<i64: 1, 32>}, {transform_indices = @transform_3, window_bounds = array<i64: 8, 32>}]} {
    %c0_i32 = arith.constant 0 : i32
    %0 = arith.cmpi eq, %arg1, %c0_i32 : i32
    %1 = arith.extui %0 : i1 to i32
    %c0_i32_0 = arith.constant 0 : i32
    %2 = arith.cmpi ne, %1, %c0_i32_0 : i32
    scf.if %2 {
      %cst_10 = arith.constant 0.000000e+00 : f32
      %12 = vector.broadcast %cst_10 : f32 to vector<8x32xf32>
      %c0_11 = arith.constant 0 : index
      %c0_12 = arith.constant 0 : index
      %13 = vector.load %arg5[%c0_11, %c0_12] : memref<8x32xf32, #tpu.memory_space<vmem>>, vector<8x32xf32>
      tpu.vector_store %arg5[%c0_11, %c0_12], %12 {strides = array<i32>} : memref<8x32xf32, #tpu.memory_space<vmem>>, vector<8x32xf32>,
    } else {
    }
    %c0 = arith.constant 0 : index
    %c0_1 = arith.constant 0 : index
    %3 = vector.load %arg5[%c0, %c0_1] : memref<8x32xf32, #tpu.memory_space<vmem>>, vector<8x32xf32>
    %c0_2 = arith.constant 0 : index
    %c0_3 = arith.constant 0 : index
    %4 = vector.load %arg2[%c0_2, %c0_3] : memref<8x256xbf16, #tpu.memory_space<vmem>>, vector<8x256xbf16>
    %c0_4 = arith.constant 0 : index
    %c0_5 = arith.constant 0 : index
    %5 = vector.load %arg3[%c0_4, %c0_5] : memref<256x32xbf16, #tpu.memory_space<vmem>>, vector<256x32xbf16>
    %cst = arith.constant dense<0.000000e+00> : vector<8x32xf32>
    %6 = tpu.matmul %4, %5, %cst {dimension_numbers = #tpu.dot_dimension_numbers<[1], [0], [0], [1], [0, 0, 1, 1], [], []>} : vector<8x256xbf16>, vector<256x32xbf16>, vector<8x32xf32> -> vector<8x32xf32>
    %7 = arith.addf %3, %6 : vector<8x32xf32>
    %c0_6 = arith.constant 0 : index
    %c0_7 = arith.constant 0 : index
    %8 = vector.load %arg5[%c0_6, %c0_7] : memref<8x32xf32, #tpu.memory_space<vmem>>, vector<8x32xf32>
    tpu.vector_store %arg5[%c0_6, %c0_7], %7 {strides = array<i32>} : memref<8x32xf32, #tpu.memory_space<vmem>>, vector<8x32xf32>,
    %c0_i32_8 = arith.constant 0 : i32
    %9 = arith.cmpi eq, %arg1, %c0_i32_8 : i32
    %10 = arith.extui %9 : i1 to i32
    %c0_i32_9 = arith.constant 0 : i32
    %11 = arith.cmpi ne, %10, %c0_i32_9 : i32
    scf.if %11 {
      %c0_10 = arith.constant 0 : index
      %c0_11 = arith.constant 0 : index
      %12 = vector.load %arg5[%c0_10, %c0_11] : memref<8x32xf32, #tpu.memory_space<vmem>>, vector<8x32xf32>
      %c0_12 = arith.constant 0 : index
      %c0_13 = arith.constant 0 : index
      %13 = vector.load %arg4[%c0_12, %c0_13] : memref<1x32xf32, #tpu.memory_space<vmem>>, vector<1x32xf32>
      %14 = vector.broadcast %13 : vector<1x32xf32> to vector<8x32xf32>
      %15 = arith.addf %12, %14 : vector<8x32xf32>
      %cst_14 = arith.constant 0.000000e+00 : f32
      %16 = vector.broadcast %cst_14 : f32 to vector<8x32xf32>
      %17 = arith.maximumf %15, %16 : vector<8x32xf32>
      %c0_15 = arith.constant 0 : index
      %c0_16 = arith.constant 0 : index
      %18 = vector.load %arg5[%c0_15, %c0_16] : memref<8x32xf32, #tpu.memory_space<vmem>>, vector<8x32xf32>
      tpu.vector_store %arg5[%c0_15, %c0_16], %17 {strides = array<i32>} : memref<8x32xf32, #tpu.memory_space<vmem>>, vector<8x32xf32>,
    } else {
    }
    return
  }
  func.func @transform_0(%arg0: i32, %arg1: i32) -> (i32, i32) {
    %c0_i32 = arith.constant 0 : i32
    return %arg0, %arg1 : i32, i32
  }
  func.func @transform_1(%arg0: i32, %arg1: i32) -> (i32, i32) {
    %c0_i32 = arith.constant 0 : i32
    %c0_i32_0 = arith.constant 0 : i32
    return %arg1, %c0_i32 : i32, i32
  }
  func.func @transform_2(%arg0: i32, %arg1: i32) -> (i32, i32) {
    %c0_i32 = arith.constant 0 : i32
    %c0_i32_0 = arith.constant 0 : i32
    %c0_i32_1 = arith.constant 0 : i32
    return %c0_i32, %c0_i32_0 : i32, i32
  }
  func.func @transform_3(%arg0: i32, %arg1: i32) -> (i32, i32) {
    %c0_i32 = arith.constant 0 : i32
    %c0_i32_0 = arith.constant 0 : i32
    return %arg0, %c0_i32 : i32, i32
  }
}

module attributes {stable_mosaic.version = 11 : i64} {
  func.func @_graph_kernel(%arg0: i32, %arg1: memref<2x4x32xf32, #tpu.memory_space<vmem>>, %arg2: memref<2x9x32xf32, #tpu.memory_space<vmem>>, %arg3: memref<15x15xf32, #tpu.memory_space<vmem>>, %arg4: memref<32x32xf32, #tpu.memory_space<vmem>>, %arg5: memref<2x16xf32, #tpu.memory_space<vmem>>, %arg6: memref<2x16xf32, #tpu.memory_space<vmem>>, %arg7: memref<32x32xf32, #tpu.memory_space<vmem>>, %arg8: memref<1x32xf32, #tpu.memory_space<vmem>>, %arg9: memref<1x32xf32, #tpu.memory_space<vmem>>, %arg10: memref<32x64xf32, #tpu.memory_space<vmem>>, %arg11: memref<1x64xf32, #tpu.memory_space<vmem>>, %arg12: memref<64x2xf32, #tpu.memory_space<vmem>>, %arg13: memref<1x2xf32, #tpu.memory_space<vmem>>, %arg14: memref<32x2xf32, #tpu.memory_space<vmem>>, %arg15: memref<1x2xf32, #tpu.memory_space<vmem>>, %arg16: memref<2x128xf32, #tpu.memory_space<vmem>>, %arg17: memref<2x15x128xf32, #tpu.memory_space<vmem>>) attributes {dimension_semantics = [#tpu.dimension_semantics<parallel>], iteration_bounds = array<i64: 1>, scalar_prefetch = 0 : i64, scratch_operands = 0 : i64, tpu.core_type = #tpu.core_type<tc>, window_params = [{transform_indices = @transform_0, window_bounds = array<i64: 2, 4, 32>}, {transform_indices = @transform_1, window_bounds = array<i64: 2, 9, 32>}, {pipeline_mode = #tpu.pipeline_mode<synchronous>, transform_indices = @transform_2, window_bounds = array<i64: 15, 15>}, {pipeline_mode = #tpu.pipeline_mode<synchronous>, transform_indices = @transform_3, window_bounds = array<i64: 32, 32>}, {pipeline_mode = #tpu.pipeline_mode<synchronous>, transform_indices = @transform_4, window_bounds = array<i64: 2, 16>}, {pipeline_mode = #tpu.pipeline_mode<synchronous>, transform_indices = @transform_5, window_bounds = array<i64: 2, 16>}, {pipeline_mode = #tpu.pipeline_mode<synchronous>, transform_indices = @transform_6, window_bounds = array<i64: 32, 32>}, {pipeline_mode = #tpu.pipeline_mode<synchronous>, transform_indices = @transform_7, window_bounds = array<i64: 1, 32>}, {pipeline_mode = #tpu.pipeline_mode<synchronous>, transform_indices = @transform_8, window_bounds = array<i64: 1, 32>}, {pipeline_mode = #tpu.pipeline_mode<synchronous>, transform_indices = @transform_9, window_bounds = array<i64: 32, 64>}, {pipeline_mode = #tpu.pipeline_mode<synchronous>, transform_indices = @transform_10, window_bounds = array<i64: 1, 64>}, {pipeline_mode = #tpu.pipeline_mode<synchronous>, transform_indices = @transform_11, window_bounds = array<i64: 64, 2>}, {pipeline_mode = #tpu.pipeline_mode<synchronous>, transform_indices = @transform_12, window_bounds = array<i64: 1, 2>}, {pipeline_mode = #tpu.pipeline_mode<synchronous>, transform_indices = @transform_13, window_bounds = array<i64: 32, 2>}, {pipeline_mode = #tpu.pipeline_mode<synchronous>, transform_indices = @transform_14, window_bounds = array<i64: 1, 2>}, {transform_indices = @transform_15, window_bounds = array<i64: 2, 128>}, {transform_indices = @transform_16, window_bounds = array<i64: 2, 15, 128>}]} {
    %c0 = arith.constant 0 : index
    %c0_0 = arith.constant 0 : index
    %0 = vector.load %arg3[%c0, %c0_0] : memref<15x15xf32, #tpu.memory_space<vmem>>, vector<15x15xf32>
    %c0_1 = arith.constant 0 : index
    %c0_2 = arith.constant 0 : index
    %c0_3 = arith.constant 0 : index
    %1 = vector.load %arg1[%c0_1, %c0_2, %c0_3] : memref<2x4x32xf32, #tpu.memory_space<vmem>>, vector<2x4x32xf32>
    %c0_4 = arith.constant 0 : index
    %c0_5 = arith.constant 0 : index
    %c0_6 = arith.constant 0 : index
    %2 = vector.load %arg2[%c0_4, %c0_5, %c0_6] : memref<2x9x32xf32, #tpu.memory_space<vmem>>, vector<2x9x32xf32>
    %cst = arith.constant 0.000000e+00 : f32
    %3 = vector.broadcast %cst : f32 to vector<2x32xf32>
    %4 = vector.extract_strided_slice %1 {offsets = [0, 0, 0], sizes = [1, 4, 32], strides = [1, 1, 1]} : vector<2x4x32xf32> to vector<1x4x32xf32>
    %5 = vector.shape_cast %4 : vector<1x4x32xf32> to vector<4x32xf32>
    %6 = vector.extract_strided_slice %2 {offsets = [0, 0, 0], sizes = [1, 9, 32], strides = [1, 1, 1]} : vector<2x9x32xf32> to vector<1x9x32xf32>
    %7 = vector.shape_cast %6 : vector<1x9x32xf32> to vector<9x32xf32>
    %cst_7 = arith.constant 0.000000e+00 : f32
    %8 = vector.broadcast %cst_7 : f32 to vector<2x32xf32>
    %9 = vector.extract_strided_slice %1 {offsets = [1, 0, 0], sizes = [1, 4, 32], strides = [1, 1, 1]} : vector<2x4x32xf32> to vector<1x4x32xf32>
    %10 = vector.shape_cast %9 : vector<1x4x32xf32> to vector<4x32xf32>
    %11 = vector.extract_strided_slice %2 {offsets = [1, 0, 0], sizes = [1, 9, 32], strides = [1, 1, 1]} : vector<2x9x32xf32> to vector<1x9x32xf32>
    %12 = vector.shape_cast %11 : vector<1x9x32xf32> to vector<9x32xf32>
    %13 = tpu.concatenate %3, %5, %7, %8, %10, %12 in 0 : vector<2x32xf32>, vector<4x32xf32>, vector<9x32xf32>, vector<2x32xf32>, vector<4x32xf32>, vector<9x32xf32> -> vector<30x32xf32>
    %c0_8 = arith.constant 0 : index
    %c0_9 = arith.constant 0 : index
    %14 = vector.load %arg4[%c0_8, %c0_9] : memref<32x32xf32, #tpu.memory_space<vmem>>, vector<32x32xf32>
    %15 = arith.truncf %13 : vector<30x32xf32> to vector<30x32xbf16>
    %16 = arith.truncf %14 : vector<32x32xf32> to vector<32x32xbf16>
    %cst_10 = arith.constant dense<0.000000e+00> : vector<30x32xf32>
    %17 = tpu.matmul %15, %16, %cst_10 {dimension_numbers = #tpu.dot_dimension_numbers<[1], [0], [0], [1], [0, 0, 1, 1], [], []>} : vector<30x32xbf16>, vector<32x32xbf16>, vector<30x32xf32> -> vector<30x32xf32>
    %c0_11 = arith.constant 0 : index
    %c0_12 = arith.constant 0 : index
    %18 = vector.load %arg5[%c0_11, %c0_12] : memref<2x16xf32, #tpu.memory_space<vmem>>, vector<2x16xf32>
    %c0_13 = arith.constant 0 : index
    %c0_14 = arith.constant 0 : index
    %19 = vector.load %arg6[%c0_13, %c0_14] : memref<2x16xf32, #tpu.memory_space<vmem>>, vector<2x16xf32>
    %20 = vector.extract_strided_slice %17 {offsets = [0, 0], sizes = [15, 32], strides = [1, 1]} : vector<30x32xf32> to vector<15x32xf32>
    %cst_15 = arith.constant 0.000000e+00 : f32
    %21 = vector.broadcast %cst_15 : f32 to vector<15x15xf32>
    %22 = vector.extract_strided_slice %20 {offsets = [0, 0], sizes = [15, 16], strides = [1, 1]} : vector<15x32xf32> to vector<15x16xf32>
    %23 = vector.extract_strided_slice %18 {offsets = [0, 0], sizes = [1, 16], strides = [1, 1]} : vector<2x16xf32> to vector<1x16xf32>
    %24 = vector.extract_strided_slice %19 {offsets = [0, 0], sizes = [1, 16], strides = [1, 1]} : vector<2x16xf32> to vector<1x16xf32>
    %25 = vector.broadcast %23 : vector<1x16xf32> to vector<15x16xf32>
    %26 = arith.mulf %22, %25 : vector<15x16xf32>
    %cst_16 = arith.constant dense<0.000000e+00> : vector<15xf32>
    %27 = vector.multi_reduction <add>, %26, %cst_16 [1] : vector<15x16xf32> to vector<15xf32>
    %28 = vector.shape_cast %27 : vector<15xf32> to vector<15x1xf32>
    %cst_17 = arith.constant dense<0.000000e+00> : vector<1x15xf32>
    %29 = tpu.matmul %24, %22, %cst_17 {dimension_numbers = #tpu.dot_dimension_numbers<[1], [1], [0], [0], [0, 0, 1, 0], [], []>} : vector<1x16xf32>, vector<15x16xf32>, vector<1x15xf32> -> vector<1x15xf32>
    %30 = vector.broadcast %28 : vector<15x1xf32> to vector<15x15xf32>
    %31 = vector.broadcast %29 : vector<1x15xf32> to vector<15x15xf32>
    %32 = arith.addf %30, %31 : vector<15x15xf32>
    %cst_18 = arith.constant 0.000000e+00 : f32
    %33 = vector.broadcast %cst_18 : f32 to vector<15x15xf32>
    %34 = arith.cmpf ogt, %32, %33 : vector<15x15xf32>
    %cst_19 = arith.constant 2.000000e-01 : f32
    %35 = vector.broadcast %cst_19 : f32 to vector<15x15xf32>
    %36 = arith.mulf %35, %32 : vector<15x15xf32>
    %37 = arith.select %34, %32, %36 : vector<15x15xi1>, vector<15x15xf32>
    %38 = arith.addf %37, %0 : vector<15x15xf32>
    %cst_20 = arith.constant dense<0xFF800000> : vector<15xf32>
    %39 = vector.multi_reduction <maximumf>, %38, %cst_20 [1] : vector<15x15xf32> to vector<15xf32>
    %40 = vector.shape_cast %39 : vector<15xf32> to vector<15x1xf32>
    %41 = vector.broadcast %40 : vector<15x1xf32> to vector<15x15xf32>
    %42 = arith.subf %38, %41 : vector<15x15xf32>
    %43 = math.exp %42 : vector<15x15xf32>
    %cst_21 = arith.constant dense<0.000000e+00> : vector<15xf32>
    %44 = vector.multi_reduction <add>, %43, %cst_21 [1] : vector<15x15xf32> to vector<15xf32>
    %45 = vector.shape_cast %44 : vector<15xf32> to vector<15x1xf32>
    %46 = vector.broadcast %45 : vector<15x1xf32> to vector<15x15xf32>
    %47 = arith.divf %43, %46 : vector<15x15xf32>
    %cst_22 = arith.constant dense<0.000000e+00> : vector<15x16xf32>
    %48 = tpu.matmul %47, %22, %cst_22 {dimension_numbers = #tpu.dot_dimension_numbers<[1], [0], [0], [1], [0, 0, 1, 1], [], []>} : vector<15x15xf32>, vector<15x16xf32>, vector<15x16xf32> -> vector<15x16xf32>
    %cst_23 = arith.constant 0.000000e+00 : f32
    %49 = vector.broadcast %cst_23 : f32 to vector<15x16xf32>
    %50 = arith.cmpf ogt, %48, %49 : vector<15x16xf32>
    %cst_24 = arith.constant 0.000000e+00 : f32
    %51 = vector.broadcast %cst_24 : f32 to vector<15x16xf32>
    %52 = arith.minimumf %48, %51 : vector<15x16xf32>
    %53 = math.exp %52 : vector<15x16xf32>
    %cst_25 = arith.constant 1.000000e+00 : f32
    %54 = vector.broadcast %cst_25 : f32 to vector<15x16xf32>
    %55 = arith.subf %53, %54 : vector<15x16xf32>
    %56 = arith.select %50, %48, %55 : vector<15x16xi1>, vector<15x16xf32>
    %57 = arith.addf %21, %47 : vector<15x15xf32>
    %58 = vector.extract_strided_slice %20 {offsets = [0, 16], sizes = [15, 16], strides = [1, 1]} : vector<15x32xf32> to vector<15x16xf32>
    %59 = vector.extract_strided_slice %18 {offsets = [1, 0], sizes = [1, 16], strides = [1, 1]} : vector<2x16xf32> to vector<1x16xf32>
    %60 = vector.extract_strided_slice %19 {offsets = [1, 0], sizes = [1, 16], strides = [1, 1]} : vector<2x16xf32> to vector<1x16xf32>
    %61 = vector.broadcast %59 : vector<1x16xf32> to vector<15x16xf32>
    %62 = arith.mulf %58, %61 : vector<15x16xf32>
    %cst_26 = arith.constant dense<0.000000e+00> : vector<15xf32>
    %63 = vector.multi_reduction <add>, %62, %cst_26 [1] : vector<15x16xf32> to vector<15xf32>
    %64 = vector.shape_cast %63 : vector<15xf32> to vector<15x1xf32>
    %cst_27 = arith.constant dense<0.000000e+00> : vector<1x15xf32>
    %65 = tpu.matmul %60, %58, %cst_27 {dimension_numbers = #tpu.dot_dimension_numbers<[1], [1], [0], [0], [0, 0, 1, 0], [], []>} : vector<1x16xf32>, vector<15x16xf32>, vector<1x15xf32> -> vector<1x15xf32>
    %66 = vector.broadcast %64 : vector<15x1xf32> to vector<15x15xf32>
    %67 = vector.broadcast %65 : vector<1x15xf32> to vector<15x15xf32>
    %68 = arith.addf %66, %67 : vector<15x15xf32>
    %cst_28 = arith.constant 0.000000e+00 : f32
    %69 = vector.broadcast %cst_28 : f32 to vector<15x15xf32>
    %70 = arith.cmpf ogt, %68, %69 : vector<15x15xf32>
    %cst_29 = arith.constant 2.000000e-01 : f32
    %71 = vector.broadcast %cst_29 : f32 to vector<15x15xf32>
    %72 = arith.mulf %71, %68 : vector<15x15xf32>
    %73 = arith.select %70, %68, %72 : vector<15x15xi1>, vector<15x15xf32>
    %74 = arith.addf %73, %0 : vector<15x15xf32>
    %cst_30 = arith.constant dense<0xFF800000> : vector<15xf32>
    %75 = vector.multi_reduction <maximumf>, %74, %cst_30 [1] : vector<15x15xf32> to vector<15xf32>
    %76 = vector.shape_cast %75 : vector<15xf32> to vector<15x1xf32>
    %77 = vector.broadcast %76 : vector<15x1xf32> to vector<15x15xf32>
    %78 = arith.subf %74, %77 : vector<15x15xf32>
    %79 = math.exp %78 : vector<15x15xf32>
    %cst_31 = arith.constant dense<0.000000e+00> : vector<15xf32>
    %80 = vector.multi_reduction <add>, %79, %cst_31 [1] : vector<15x15xf32> to vector<15xf32>
    %81 = vector.shape_cast %80 : vector<15xf32> to vector<15x1xf32>
    %82 = vector.broadcast %81 : vector<15x1xf32> to vector<15x15xf32>
    %83 = arith.divf %79, %82 : vector<15x15xf32>
    %cst_32 = arith.constant dense<0.000000e+00> : vector<15x16xf32>
    %84 = tpu.matmul %83, %58, %cst_32 {dimension_numbers = #tpu.dot_dimension_numbers<[1], [0], [0], [1], [0, 0, 1, 1], [], []>} : vector<15x15xf32>, vector<15x16xf32>, vector<15x16xf32> -> vector<15x16xf32>
    %cst_33 = arith.constant 0.000000e+00 : f32
    %85 = vector.broadcast %cst_33 : f32 to vector<15x16xf32>
    %86 = arith.cmpf ogt, %84, %85 : vector<15x16xf32>
    %cst_34 = arith.constant 0.000000e+00 : f32
    %87 = vector.broadcast %cst_34 : f32 to vector<15x16xf32>
    %88 = arith.minimumf %84, %87 : vector<15x16xf32>
    %89 = math.exp %88 : vector<15x16xf32>
    %cst_35 = arith.constant 1.000000e+00 : f32
    %90 = vector.broadcast %cst_35 : f32 to vector<15x16xf32>
    %91 = arith.subf %89, %90 : vector<15x16xf32>
    %92 = arith.select %86, %84, %91 : vector<15x16xi1>, vector<15x16xf32>
    %93 = arith.addf %57, %83 : vector<15x15xf32>
    %94 = tpu.concatenate %56, %92 in 1 : vector<15x16xf32>, vector<15x16xf32> -> vector<15x32xf32>
    %cst_36 = arith.constant 5.000000e-01 : f32
    %95 = vector.broadcast %cst_36 : f32 to vector<15x15xf32>
    %96 = arith.mulf %93, %95 : vector<15x15xf32>
    %cst_37 = arith.constant 0.000000e+00 : f32
    %97 = vector.broadcast %cst_37 : f32 to vector<15x113xf32>
    %98 = tpu.concatenate %96, %97 in 1 : vector<15x15xf32>, vector<15x113xf32> -> vector<15x128xf32>
    %c0_38 = arith.constant 0 : index
    %c0_39 = arith.constant 0 : index
    %c0_40 = arith.constant 0 : index
    %99 = vector.load %arg17[%c0_38, %c0_39, %c0_40] : memref<2x15x128xf32, #tpu.memory_space<vmem>>, vector<1x15x128xf32>
    %100 = vector.shape_cast %99 : vector<1x15x128xf32> to vector<15x128xf32>
    %101 = vector.shape_cast %98 : vector<15x128xf32> to vector<1x15x128xf32>
    tpu.vector_store %arg17[%c0_38, %c0_39, %c0_40], %101 {strides = array<i32>} : memref<2x15x128xf32, #tpu.memory_space<vmem>>, vector<1x15x128xf32>,
    %102 = vector.extract_strided_slice %17 {offsets = [15, 0], sizes = [15, 32], strides = [1, 1]} : vector<30x32xf32> to vector<15x32xf32>
    %cst_41 = arith.constant 0.000000e+00 : f32
    %103 = vector.broadcast %cst_41 : f32 to vector<15x15xf32>
    %104 = vector.extract_strided_slice %102 {offsets = [0, 0], sizes = [15, 16], strides = [1, 1]} : vector<15x32xf32> to vector<15x16xf32>
    %105 = vector.extract_strided_slice %18 {offsets = [0, 0], sizes = [1, 16], strides = [1, 1]} : vector<2x16xf32> to vector<1x16xf32>
    %106 = vector.extract_strided_slice %19 {offsets = [0, 0], sizes = [1, 16], strides = [1, 1]} : vector<2x16xf32> to vector<1x16xf32>
    %107 = vector.broadcast %105 : vector<1x16xf32> to vector<15x16xf32>
    %108 = arith.mulf %104, %107 : vector<15x16xf32>
    %cst_42 = arith.constant dense<0.000000e+00> : vector<15xf32>
    %109 = vector.multi_reduction <add>, %108, %cst_42 [1] : vector<15x16xf32> to vector<15xf32>
    %110 = vector.shape_cast %109 : vector<15xf32> to vector<15x1xf32>
    %cst_43 = arith.constant dense<0.000000e+00> : vector<1x15xf32>
    %111 = tpu.matmul %106, %104, %cst_43 {dimension_numbers = #tpu.dot_dimension_numbers<[1], [1], [0], [0], [0, 0, 1, 0], [], []>} : vector<1x16xf32>, vector<15x16xf32>, vector<1x15xf32> -> vector<1x15xf32>
    %112 = vector.broadcast %110 : vector<15x1xf32> to vector<15x15xf32>
    %113 = vector.broadcast %111 : vector<1x15xf32> to vector<15x15xf32>
    %114 = arith.addf %112, %113 : vector<15x15xf32>
    %cst_44 = arith.constant 0.000000e+00 : f32
    %115 = vector.broadcast %cst_44 : f32 to vector<15x15xf32>
    %116 = arith.cmpf ogt, %114, %115 : vector<15x15xf32>
    %cst_45 = arith.constant 2.000000e-01 : f32
    %117 = vector.broadcast %cst_45 : f32 to vector<15x15xf32>
    %118 = arith.mulf %117, %114 : vector<15x15xf32>
    %119 = arith.select %116, %114, %118 : vector<15x15xi1>, vector<15x15xf32>
    %120 = arith.addf %119, %0 : vector<15x15xf32>
    %cst_46 = arith.constant dense<0xFF800000> : vector<15xf32>
    %121 = vector.multi_reduction <maximumf>, %120, %cst_46 [1] : vector<15x15xf32> to vector<15xf32>
    %122 = vector.shape_cast %121 : vector<15xf32> to vector<15x1xf32>
    %123 = vector.broadcast %122 : vector<15x1xf32> to vector<15x15xf32>
    %124 = arith.subf %120, %123 : vector<15x15xf32>
    %125 = math.exp %124 : vector<15x15xf32>
    %cst_47 = arith.constant dense<0.000000e+00> : vector<15xf32>
    %126 = vector.multi_reduction <add>, %125, %cst_47 [1] : vector<15x15xf32> to vector<15xf32>
    %127 = vector.shape_cast %126 : vector<15xf32> to vector<15x1xf32>
    %128 = vector.broadcast %127 : vector<15x1xf32> to vector<15x15xf32>
    %129 = arith.divf %125, %128 : vector<15x15xf32>
    %cst_48 = arith.constant dense<0.000000e+00> : vector<15x16xf32>
    %130 = tpu.matmul %129, %104, %cst_48 {dimension_numbers = #tpu.dot_dimension_numbers<[1], [0], [0], [1], [0, 0, 1, 1], [], []>} : vector<15x15xf32>, vector<15x16xf32>, vector<15x16xf32> -> vector<15x16xf32>
    %cst_49 = arith.constant 0.000000e+00 : f32
    %131 = vector.broadcast %cst_49 : f32 to vector<15x16xf32>
    %132 = arith.cmpf ogt, %130, %131 : vector<15x16xf32>
    %cst_50 = arith.constant 0.000000e+00 : f32
    %133 = vector.broadcast %cst_50 : f32 to vector<15x16xf32>
    %134 = arith.minimumf %130, %133 : vector<15x16xf32>
    %135 = math.exp %134 : vector<15x16xf32>
    %cst_51 = arith.constant 1.000000e+00 : f32
    %136 = vector.broadcast %cst_51 : f32 to vector<15x16xf32>
    %137 = arith.subf %135, %136 : vector<15x16xf32>
    %138 = arith.select %132, %130, %137 : vector<15x16xi1>, vector<15x16xf32>
    %139 = arith.addf %103, %129 : vector<15x15xf32>
    %140 = vector.extract_strided_slice %102 {offsets = [0, 16], sizes = [15, 16], strides = [1, 1]} : vector<15x32xf32> to vector<15x16xf32>
    %141 = vector.extract_strided_slice %18 {offsets = [1, 0], sizes = [1, 16], strides = [1, 1]} : vector<2x16xf32> to vector<1x16xf32>
    %142 = vector.extract_strided_slice %19 {offsets = [1, 0], sizes = [1, 16], strides = [1, 1]} : vector<2x16xf32> to vector<1x16xf32>
    %143 = vector.broadcast %141 : vector<1x16xf32> to vector<15x16xf32>
    %144 = arith.mulf %140, %143 : vector<15x16xf32>
    %cst_52 = arith.constant dense<0.000000e+00> : vector<15xf32>
    %145 = vector.multi_reduction <add>, %144, %cst_52 [1] : vector<15x16xf32> to vector<15xf32>
    %146 = vector.shape_cast %145 : vector<15xf32> to vector<15x1xf32>
    %cst_53 = arith.constant dense<0.000000e+00> : vector<1x15xf32>
    %147 = tpu.matmul %142, %140, %cst_53 {dimension_numbers = #tpu.dot_dimension_numbers<[1], [1], [0], [0], [0, 0, 1, 0], [], []>} : vector<1x16xf32>, vector<15x16xf32>, vector<1x15xf32> -> vector<1x15xf32>
    %148 = vector.broadcast %146 : vector<15x1xf32> to vector<15x15xf32>
    %149 = vector.broadcast %147 : vector<1x15xf32> to vector<15x15xf32>
    %150 = arith.addf %148, %149 : vector<15x15xf32>
    %cst_54 = arith.constant 0.000000e+00 : f32
    %151 = vector.broadcast %cst_54 : f32 to vector<15x15xf32>
    %152 = arith.cmpf ogt, %150, %151 : vector<15x15xf32>
    %cst_55 = arith.constant 2.000000e-01 : f32
    %153 = vector.broadcast %cst_55 : f32 to vector<15x15xf32>
    %154 = arith.mulf %153, %150 : vector<15x15xf32>
    %155 = arith.select %152, %150, %154 : vector<15x15xi1>, vector<15x15xf32>
    %156 = arith.addf %155, %0 : vector<15x15xf32>
    %cst_56 = arith.constant dense<0xFF800000> : vector<15xf32>
    %157 = vector.multi_reduction <maximumf>, %156, %cst_56 [1] : vector<15x15xf32> to vector<15xf32>
    %158 = vector.shape_cast %157 : vector<15xf32> to vector<15x1xf32>
    %159 = vector.broadcast %158 : vector<15x1xf32> to vector<15x15xf32>
    %160 = arith.subf %156, %159 : vector<15x15xf32>
    %161 = math.exp %160 : vector<15x15xf32>
    %cst_57 = arith.constant dense<0.000000e+00> : vector<15xf32>
    %162 = vector.multi_reduction <add>, %161, %cst_57 [1] : vector<15x15xf32> to vector<15xf32>
    %163 = vector.shape_cast %162 : vector<15xf32> to vector<15x1xf32>
    %164 = vector.broadcast %163 : vector<15x1xf32> to vector<15x15xf32>
    %165 = arith.divf %161, %164 : vector<15x15xf32>
    %cst_58 = arith.constant dense<0.000000e+00> : vector<15x16xf32>
    %166 = tpu.matmul %165, %140, %cst_58 {dimension_numbers = #tpu.dot_dimension_numbers<[1], [0], [0], [1], [0, 0, 1, 1], [], []>} : vector<15x15xf32>, vector<15x16xf32>, vector<15x16xf32> -> vector<15x16xf32>
    %cst_59 = arith.constant 0.000000e+00 : f32
    %167 = vector.broadcast %cst_59 : f32 to vector<15x16xf32>
    %168 = arith.cmpf ogt, %166, %167 : vector<15x16xf32>
    %cst_60 = arith.constant 0.000000e+00 : f32
    %169 = vector.broadcast %cst_60 : f32 to vector<15x16xf32>
    %170 = arith.minimumf %166, %169 : vector<15x16xf32>
    %171 = math.exp %170 : vector<15x16xf32>
    %cst_61 = arith.constant 1.000000e+00 : f32
    %172 = vector.broadcast %cst_61 : f32 to vector<15x16xf32>
    %173 = arith.subf %171, %172 : vector<15x16xf32>
    %174 = arith.select %168, %166, %173 : vector<15x16xi1>, vector<15x16xf32>
    %175 = arith.addf %139, %165 : vector<15x15xf32>
    %176 = tpu.concatenate %138, %174 in 1 : vector<15x16xf32>, vector<15x16xf32> -> vector<15x32xf32>
    %cst_62 = arith.constant 5.000000e-01 : f32
    %177 = vector.broadcast %cst_62 : f32 to vector<15x15xf32>
    %178 = arith.mulf %175, %177 : vector<15x15xf32>
    %cst_63 = arith.constant 0.000000e+00 : f32
    %179 = vector.broadcast %cst_63 : f32 to vector<15x113xf32>
    %180 = tpu.concatenate %178, %179 in 1 : vector<15x15xf32>, vector<15x113xf32> -> vector<15x128xf32>
    %c1 = arith.constant 1 : index
    %c0_64 = arith.constant 0 : index
    %c0_65 = arith.constant 0 : index
    %181 = vector.load %arg17[%c1, %c0_64, %c0_65] : memref<2x15x128xf32, #tpu.memory_space<vmem>>, vector<1x15x128xf32>
    %182 = vector.shape_cast %181 : vector<1x15x128xf32> to vector<15x128xf32>
    %183 = vector.shape_cast %180 : vector<15x128xf32> to vector<1x15x128xf32>
    tpu.vector_store %arg17[%c1, %c0_64, %c0_65], %183 {strides = array<i32>} : memref<2x15x128xf32, #tpu.memory_space<vmem>>, vector<1x15x128xf32>,
    %184 = tpu.concatenate %94, %176 in 0 : vector<15x32xf32>, vector<15x32xf32> -> vector<30x32xf32>
    %c0_66 = arith.constant 0 : index
    %c0_67 = arith.constant 0 : index
    %185 = vector.load %arg7[%c0_66, %c0_67] : memref<32x32xf32, #tpu.memory_space<vmem>>, vector<32x32xf32>
    %186 = arith.truncf %184 : vector<30x32xf32> to vector<30x32xbf16>
    %187 = arith.truncf %185 : vector<32x32xf32> to vector<32x32xbf16>
    %cst_68 = arith.constant dense<0.000000e+00> : vector<30x32xf32>
    %188 = tpu.matmul %186, %187, %cst_68 {dimension_numbers = #tpu.dot_dimension_numbers<[1], [0], [0], [1], [0, 0, 1, 1], [], []>} : vector<30x32xbf16>, vector<32x32xbf16>, vector<30x32xf32> -> vector<30x32xf32>
    %c0_69 = arith.constant 0 : index
    %c0_70 = arith.constant 0 : index
    %189 = vector.load %arg8[%c0_69, %c0_70] : memref<1x32xf32, #tpu.memory_space<vmem>>, vector<1x32xf32>
    %c0_71 = arith.constant 0 : index
    %c0_72 = arith.constant 0 : index
    %190 = vector.load %arg9[%c0_71, %c0_72] : memref<1x32xf32, #tpu.memory_space<vmem>>, vector<1x32xf32>
    %191 = vector.extract_strided_slice %188 {offsets = [0, 0], sizes = [15, 32], strides = [1, 1]} : vector<30x32xf32> to vector<15x32xf32>
    %192 = vector.broadcast %189 : vector<1x32xf32> to vector<15x32xf32>
    %193 = arith.mulf %191, %192 : vector<15x32xf32>
    %cst_73 = arith.constant dense<0.000000e+00> : vector<15xf32>
    %194 = vector.multi_reduction <add>, %193, %cst_73 [1] : vector<15x32xf32> to vector<15xf32>
    %195 = vector.shape_cast %194 : vector<15xf32> to vector<15x1xf32>
    %cst_74 = arith.constant dense<0.000000e+00> : vector<1x15xf32>
    %196 = tpu.matmul %190, %191, %cst_74 {dimension_numbers = #tpu.dot_dimension_numbers<[1], [1], [0], [0], [0, 0, 1, 0], [], []>} : vector<1x32xf32>, vector<15x32xf32>, vector<1x15xf32> -> vector<1x15xf32>
    %197 = vector.broadcast %195 : vector<15x1xf32> to vector<15x15xf32>
    %198 = vector.broadcast %196 : vector<1x15xf32> to vector<15x15xf32>
    %199 = arith.addf %197, %198 : vector<15x15xf32>
    %cst_75 = arith.constant 0.000000e+00 : f32
    %200 = vector.broadcast %cst_75 : f32 to vector<15x15xf32>
    %201 = arith.cmpf ogt, %199, %200 : vector<15x15xf32>
    %cst_76 = arith.constant 2.000000e-01 : f32
    %202 = vector.broadcast %cst_76 : f32 to vector<15x15xf32>
    %203 = arith.mulf %202, %199 : vector<15x15xf32>
    %204 = arith.select %201, %199, %203 : vector<15x15xi1>, vector<15x15xf32>
    %205 = arith.addf %204, %0 : vector<15x15xf32>
    %cst_77 = arith.constant dense<0xFF800000> : vector<15xf32>
    %206 = vector.multi_reduction <maximumf>, %205, %cst_77 [1] : vector<15x15xf32> to vector<15xf32>
    %207 = vector.shape_cast %206 : vector<15xf32> to vector<15x1xf32>
    %208 = vector.broadcast %207 : vector<15x1xf32> to vector<15x15xf32>
    %209 = arith.subf %205, %208 : vector<15x15xf32>
    %210 = math.exp %209 : vector<15x15xf32>
    %cst_78 = arith.constant dense<0.000000e+00> : vector<15xf32>
    %211 = vector.multi_reduction <add>, %210, %cst_78 [1] : vector<15x15xf32> to vector<15xf32>
    %212 = vector.shape_cast %211 : vector<15xf32> to vector<15x1xf32>
    %213 = vector.broadcast %212 : vector<15x1xf32> to vector<15x15xf32>
    %214 = arith.divf %210, %213 : vector<15x15xf32>
    %cst_79 = arith.constant dense<0.000000e+00> : vector<15x32xf32>
    %215 = tpu.matmul %214, %191, %cst_79 {dimension_numbers = #tpu.dot_dimension_numbers<[1], [0], [0], [1], [0, 0, 1, 1], [], []>} : vector<15x15xf32>, vector<15x32xf32>, vector<15x32xf32> -> vector<15x32xf32>
    %cst_80 = arith.constant 0.000000e+00 : f32
    %216 = vector.broadcast %cst_80 : f32 to vector<15x32xf32>
    %217 = arith.cmpf ogt, %215, %216 : vector<15x32xf32>
    %cst_81 = arith.constant 0.000000e+00 : f32
    %218 = vector.broadcast %cst_81 : f32 to vector<15x32xf32>
    %219 = arith.minimumf %215, %218 : vector<15x32xf32>
    %220 = math.exp %219 : vector<15x32xf32>
    %cst_82 = arith.constant 1.000000e+00 : f32
    %221 = vector.broadcast %cst_82 : f32 to vector<15x32xf32>
    %222 = arith.subf %220, %221 : vector<15x32xf32>
    %223 = arith.select %217, %215, %222 : vector<15x32xi1>, vector<15x32xf32>
    %224 = vector.extract_strided_slice %223 {offsets = [0, 0], sizes = [1, 32], strides = [1, 1]} : vector<15x32xf32> to vector<1x32xf32>
    %c0_83 = arith.constant 0 : index
    %c0_84 = arith.constant 0 : index
    %225 = vector.load %arg10[%c0_83, %c0_84] : memref<32x64xf32, #tpu.memory_space<vmem>>, vector<32x64xf32>
    %cst_85 = arith.constant dense<0.000000e+00> : vector<1x64xf32>
    %226 = tpu.matmul %224, %225, %cst_85 {dimension_numbers = #tpu.dot_dimension_numbers<[1], [0], [0], [1], [0, 0, 1, 1], [], []>} : vector<1x32xf32>, vector<32x64xf32>, vector<1x64xf32> -> vector<1x64xf32>
    %c0_86 = arith.constant 0 : index
    %c0_87 = arith.constant 0 : index
    %227 = vector.load %arg11[%c0_86, %c0_87] : memref<1x64xf32, #tpu.memory_space<vmem>>, vector<1x64xf32>
    %228 = arith.addf %226, %227 : vector<1x64xf32>
    %cst_88 = arith.constant 0.000000e+00 : f32
    %229 = vector.broadcast %cst_88 : f32 to vector<1x64xf32>
    %230 = arith.maximumf %228, %229 : vector<1x64xf32>
    %c0_89 = arith.constant 0 : index
    %c0_90 = arith.constant 0 : index
    %231 = vector.load %arg12[%c0_89, %c0_90] : memref<64x2xf32, #tpu.memory_space<vmem>>, vector<64x2xf32>
    %cst_91 = arith.constant dense<0.000000e+00> : vector<1x2xf32>
    %232 = tpu.matmul %230, %231, %cst_91 {dimension_numbers = #tpu.dot_dimension_numbers<[1], [0], [0], [1], [0, 0, 1, 1], [], []>} : vector<1x64xf32>, vector<64x2xf32>, vector<1x2xf32> -> vector<1x2xf32>
    %c0_92 = arith.constant 0 : index
    %c0_93 = arith.constant 0 : index
    %233 = vector.load %arg13[%c0_92, %c0_93] : memref<1x2xf32, #tpu.memory_space<vmem>>, vector<1x2xf32>
    %234 = arith.addf %232, %233 : vector<1x2xf32>
    %235 = vector.extract_strided_slice %1 {offsets = [0, 0, 0], sizes = [1, 4, 32], strides = [1, 1, 1]} : vector<2x4x32xf32> to vector<1x4x32xf32>
    %236 = vector.shape_cast %235 : vector<1x4x32xf32> to vector<4x32xf32>
    %cst_94 = arith.constant dense<0.000000e+00> : vector<32xf32>
    %237 = vector.multi_reduction <add>, %236, %cst_94 [0] : vector<4x32xf32> to vector<32xf32>
    %238 = vector.shape_cast %237 : vector<32xf32> to vector<1x32xf32>
    %cst_95 = arith.constant 4.000000e+00 : f32
    %239 = vector.broadcast %cst_95 : f32 to vector<1x32xf32>
    %240 = arith.divf %238, %239 : vector<1x32xf32>
    %c0_96 = arith.constant 0 : index
    %c0_97 = arith.constant 0 : index
    %241 = vector.load %arg14[%c0_96, %c0_97] : memref<32x2xf32, #tpu.memory_space<vmem>>, vector<32x2xf32>
    %cst_98 = arith.constant dense<0.000000e+00> : vector<1x2xf32>
    %242 = tpu.matmul %240, %241, %cst_98 {dimension_numbers = #tpu.dot_dimension_numbers<[1], [0], [0], [1], [0, 0, 1, 1], [], []>} : vector<1x32xf32>, vector<32x2xf32>, vector<1x2xf32> -> vector<1x2xf32>
    %c0_99 = arith.constant 0 : index
    %c0_100 = arith.constant 0 : index
    %243 = vector.load %arg15[%c0_99, %c0_100] : memref<1x2xf32, #tpu.memory_space<vmem>>, vector<1x2xf32>
    %244 = arith.addf %242, %243 : vector<1x2xf32>
    %cst_101 = arith.constant 0.000000e+00 : f32
    %245 = vector.broadcast %cst_101 : f32 to vector<1x28xf32>
    %246 = tpu.concatenate %240, %230, %234, %244, %245 in 1 : vector<1x32xf32>, vector<1x64xf32>, vector<1x2xf32>, vector<1x2xf32>, vector<1x28xf32> -> vector<1x128xf32>
    %247 = vector.extract_strided_slice %188 {offsets = [15, 0], sizes = [15, 32], strides = [1, 1]} : vector<30x32xf32> to vector<15x32xf32>
    %248 = vector.broadcast %189 : vector<1x32xf32> to vector<15x32xf32>
    %249 = arith.mulf %247, %248 : vector<15x32xf32>
    %cst_102 = arith.constant dense<0.000000e+00> : vector<15xf32>
    %250 = vector.multi_reduction <add>, %249, %cst_102 [1] : vector<15x32xf32> to vector<15xf32>
    %251 = vector.shape_cast %250 : vector<15xf32> to vector<15x1xf32>
    %cst_103 = arith.constant dense<0.000000e+00> : vector<1x15xf32>
    %252 = tpu.matmul %190, %247, %cst_103 {dimension_numbers = #tpu.dot_dimension_numbers<[1], [1], [0], [0], [0, 0, 1, 0], [], []>} : vector<1x32xf32>, vector<15x32xf32>, vector<1x15xf32> -> vector<1x15xf32>
    %253 = vector.broadcast %251 : vector<15x1xf32> to vector<15x15xf32>
    %254 = vector.broadcast %252 : vector<1x15xf32> to vector<15x15xf32>
    %255 = arith.addf %253, %254 : vector<15x15xf32>
    %cst_104 = arith.constant 0.000000e+00 : f32
    %256 = vector.broadcast %cst_104 : f32 to vector<15x15xf32>
    %257 = arith.cmpf ogt, %255, %256 : vector<15x15xf32>
    %cst_105 = arith.constant 2.000000e-01 : f32
    %258 = vector.broadcast %cst_105 : f32 to vector<15x15xf32>
    %259 = arith.mulf %258, %255 : vector<15x15xf32>
    %260 = arith.select %257, %255, %259 : vector<15x15xi1>, vector<15x15xf32>
    %261 = arith.addf %260, %0 : vector<15x15xf32>
    %cst_106 = arith.constant dense<0xFF800000> : vector<15xf32>
    %262 = vector.multi_reduction <maximumf>, %261, %cst_106 [1] : vector<15x15xf32> to vector<15xf32>
    %263 = vector.shape_cast %262 : vector<15xf32> to vector<15x1xf32>
    %264 = vector.broadcast %263 : vector<15x1xf32> to vector<15x15xf32>
    %265 = arith.subf %261, %264 : vector<15x15xf32>
    %266 = math.exp %265 : vector<15x15xf32>
    %cst_107 = arith.constant dense<0.000000e+00> : vector<15xf32>
    %267 = vector.multi_reduction <add>, %266, %cst_107 [1] : vector<15x15xf32> to vector<15xf32>
    %268 = vector.shape_cast %267 : vector<15xf32> to vector<15x1xf32>
    %269 = vector.broadcast %268 : vector<15x1xf32> to vector<15x15xf32>
    %270 = arith.divf %266, %269 : vector<15x15xf32>
    %cst_108 = arith.constant dense<0.000000e+00> : vector<15x32xf32>
    %271 = tpu.matmul %270, %247, %cst_108 {dimension_numbers = #tpu.dot_dimension_numbers<[1], [0], [0], [1], [0, 0, 1, 1], [], []>} : vector<15x15xf32>, vector<15x32xf32>, vector<15x32xf32> -> vector<15x32xf32>
    %cst_109 = arith.constant 0.000000e+00 : f32
    %272 = vector.broadcast %cst_109 : f32 to vector<15x32xf32>
    %273 = arith.cmpf ogt, %271, %272 : vector<15x32xf32>
    %cst_110 = arith.constant 0.000000e+00 : f32
    %274 = vector.broadcast %cst_110 : f32 to vector<15x32xf32>
    %275 = arith.minimumf %271, %274 : vector<15x32xf32>
    %276 = math.exp %275 : vector<15x32xf32>
    %cst_111 = arith.constant 1.000000e+00 : f32
    %277 = vector.broadcast %cst_111 : f32 to vector<15x32xf32>
    %278 = arith.subf %276, %277 : vector<15x32xf32>
    %279 = arith.select %273, %271, %278 : vector<15x32xi1>, vector<15x32xf32>
    %280 = vector.extract_strided_slice %279 {offsets = [0, 0], sizes = [1, 32], strides = [1, 1]} : vector<15x32xf32> to vector<1x32xf32>
    %c0_112 = arith.constant 0 : index
    %c0_113 = arith.constant 0 : index
    %281 = vector.load %arg10[%c0_112, %c0_113] : memref<32x64xf32, #tpu.memory_space<vmem>>, vector<32x64xf32>
    %cst_114 = arith.constant dense<0.000000e+00> : vector<1x64xf32>
    %282 = tpu.matmul %280, %281, %cst_114 {dimension_numbers = #tpu.dot_dimension_numbers<[1], [0], [0], [1], [0, 0, 1, 1], [], []>} : vector<1x32xf32>, vector<32x64xf32>, vector<1x64xf32> -> vector<1x64xf32>
    %c0_115 = arith.constant 0 : index
    %c0_116 = arith.constant 0 : index
    %283 = vector.load %arg11[%c0_115, %c0_116] : memref<1x64xf32, #tpu.memory_space<vmem>>, vector<1x64xf32>
    %284 = arith.addf %282, %283 : vector<1x64xf32>
    %cst_117 = arith.constant 0.000000e+00 : f32
    %285 = vector.broadcast %cst_117 : f32 to vector<1x64xf32>
    %286 = arith.maximumf %284, %285 : vector<1x64xf32>
    %c0_118 = arith.constant 0 : index
    %c0_119 = arith.constant 0 : index
    %287 = vector.load %arg12[%c0_118, %c0_119] : memref<64x2xf32, #tpu.memory_space<vmem>>, vector<64x2xf32>
    %cst_120 = arith.constant dense<0.000000e+00> : vector<1x2xf32>
    %288 = tpu.matmul %286, %287, %cst_120 {dimension_numbers = #tpu.dot_dimension_numbers<[1], [0], [0], [1], [0, 0, 1, 1], [], []>} : vector<1x64xf32>, vector<64x2xf32>, vector<1x2xf32> -> vector<1x2xf32>
    %c0_121 = arith.constant 0 : index
    %c0_122 = arith.constant 0 : index
    %289 = vector.load %arg13[%c0_121, %c0_122] : memref<1x2xf32, #tpu.memory_space<vmem>>, vector<1x2xf32>
    %290 = arith.addf %288, %289 : vector<1x2xf32>
    %291 = vector.extract_strided_slice %1 {offsets = [1, 0, 0], sizes = [1, 4, 32], strides = [1, 1, 1]} : vector<2x4x32xf32> to vector<1x4x32xf32>
    %292 = vector.shape_cast %291 : vector<1x4x32xf32> to vector<4x32xf32>
    %cst_123 = arith.constant dense<0.000000e+00> : vector<32xf32>
    %293 = vector.multi_reduction <add>, %292, %cst_123 [0] : vector<4x32xf32> to vector<32xf32>
    %294 = vector.shape_cast %293 : vector<32xf32> to vector<1x32xf32>
    %cst_124 = arith.constant 4.000000e+00 : f32
    %295 = vector.broadcast %cst_124 : f32 to vector<1x32xf32>
    %296 = arith.divf %294, %295 : vector<1x32xf32>
    %c0_125 = arith.constant 0 : index
    %c0_126 = arith.constant 0 : index
    %297 = vector.load %arg14[%c0_125, %c0_126] : memref<32x2xf32, #tpu.memory_space<vmem>>, vector<32x2xf32>
    %cst_127 = arith.constant dense<0.000000e+00> : vector<1x2xf32>
    %298 = tpu.matmul %296, %297, %cst_127 {dimension_numbers = #tpu.dot_dimension_numbers<[1], [0], [0], [1], [0, 0, 1, 1], [], []>} : vector<1x32xf32>, vector<32x2xf32>, vector<1x2xf32> -> vector<1x2xf32>
    %c0_128 = arith.constant 0 : index
    %c0_129 = arith.constant 0 : index
    %299 = vector.load %arg15[%c0_128, %c0_129] : memref<1x2xf32, #tpu.memory_space<vmem>>, vector<1x2xf32>
    %300 = arith.addf %298, %299 : vector<1x2xf32>
    %cst_130 = arith.constant 0.000000e+00 : f32
    %301 = vector.broadcast %cst_130 : f32 to vector<1x28xf32>
    %302 = tpu.concatenate %296, %286, %290, %300, %301 in 1 : vector<1x32xf32>, vector<1x64xf32>, vector<1x2xf32>, vector<1x2xf32>, vector<1x28xf32> -> vector<1x128xf32>
    %303 = tpu.concatenate %246, %302 in 0 : vector<1x128xf32>, vector<1x128xf32> -> vector<2x128xf32>
    %c0_131 = arith.constant 0 : index
    %c0_132 = arith.constant 0 : index
    %304 = vector.load %arg16[%c0_131, %c0_132] : memref<2x128xf32, #tpu.memory_space<vmem>>, vector<2x128xf32>
    tpu.vector_store %arg16[%c0_131, %c0_132], %303 {strides = array<i32>} : memref<2x128xf32, #tpu.memory_space<vmem>>, vector<2x128xf32>,
    return
  }
  func.func @transform_0(%arg0: i32) -> (i32, i32, i32) {
    %c0_i32 = arith.constant 0 : i32
    %c0_i32_0 = arith.constant 0 : i32
    %c0_i32_1 = arith.constant 0 : i32
    return %arg0, %c0_i32, %c0_i32_0 : i32, i32, i32
  }
  func.func @transform_1(%arg0: i32) -> (i32, i32, i32) {
    %c0_i32 = arith.constant 0 : i32
    %c0_i32_0 = arith.constant 0 : i32
    %c0_i32_1 = arith.constant 0 : i32
    return %arg0, %c0_i32, %c0_i32_0 : i32, i32, i32
  }
  func.func @transform_2(%arg0: i32) -> (i32, i32) {
    %c0_i32 = arith.constant 0 : i32
    %c0_i32_0 = arith.constant 0 : i32
    %c0_i32_1 = arith.constant 0 : i32
    return %c0_i32, %c0_i32_0 : i32, i32
  }
  func.func @transform_3(%arg0: i32) -> (i32, i32) {
    %c0_i32 = arith.constant 0 : i32
    %c0_i32_0 = arith.constant 0 : i32
    %c0_i32_1 = arith.constant 0 : i32
    return %c0_i32, %c0_i32_0 : i32, i32
  }
  func.func @transform_4(%arg0: i32) -> (i32, i32) {
    %c0_i32 = arith.constant 0 : i32
    %c0_i32_0 = arith.constant 0 : i32
    %c0_i32_1 = arith.constant 0 : i32
    return %c0_i32, %c0_i32_0 : i32, i32
  }
  func.func @transform_5(%arg0: i32) -> (i32, i32) {
    %c0_i32 = arith.constant 0 : i32
    %c0_i32_0 = arith.constant 0 : i32
    %c0_i32_1 = arith.constant 0 : i32
    return %c0_i32, %c0_i32_0 : i32, i32
  }
  func.func @transform_6(%arg0: i32) -> (i32, i32) {
    %c0_i32 = arith.constant 0 : i32
    %c0_i32_0 = arith.constant 0 : i32
    %c0_i32_1 = arith.constant 0 : i32
    return %c0_i32, %c0_i32_0 : i32, i32
  }
  func.func @transform_7(%arg0: i32) -> (i32, i32) {
    %c0_i32 = arith.constant 0 : i32
    %c0_i32_0 = arith.constant 0 : i32
    %c0_i32_1 = arith.constant 0 : i32
    return %c0_i32, %c0_i32_0 : i32, i32
  }
  func.func @transform_8(%arg0: i32) -> (i32, i32) {
    %c0_i32 = arith.constant 0 : i32
    %c0_i32_0 = arith.constant 0 : i32
    %c0_i32_1 = arith.constant 0 : i32
    return %c0_i32, %c0_i32_0 : i32, i32
  }
  func.func @transform_9(%arg0: i32) -> (i32, i32) {
    %c0_i32 = arith.constant 0 : i32
    %c0_i32_0 = arith.constant 0 : i32
    %c0_i32_1 = arith.constant 0 : i32
    return %c0_i32, %c0_i32_0 : i32, i32
  }
  func.func @transform_10(%arg0: i32) -> (i32, i32) {
    %c0_i32 = arith.constant 0 : i32
    %c0_i32_0 = arith.constant 0 : i32
    %c0_i32_1 = arith.constant 0 : i32
    return %c0_i32, %c0_i32_0 : i32, i32
  }
  func.func @transform_11(%arg0: i32) -> (i32, i32) {
    %c0_i32 = arith.constant 0 : i32
    %c0_i32_0 = arith.constant 0 : i32
    %c0_i32_1 = arith.constant 0 : i32
    return %c0_i32, %c0_i32_0 : i32, i32
  }
  func.func @transform_12(%arg0: i32) -> (i32, i32) {
    %c0_i32 = arith.constant 0 : i32
    %c0_i32_0 = arith.constant 0 : i32
    %c0_i32_1 = arith.constant 0 : i32
    return %c0_i32, %c0_i32_0 : i32, i32
  }
  func.func @transform_13(%arg0: i32) -> (i32, i32) {
    %c0_i32 = arith.constant 0 : i32
    %c0_i32_0 = arith.constant 0 : i32
    %c0_i32_1 = arith.constant 0 : i32
    return %c0_i32, %c0_i32_0 : i32, i32
  }
  func.func @transform_14(%arg0: i32) -> (i32, i32) {
    %c0_i32 = arith.constant 0 : i32
    %c0_i32_0 = arith.constant 0 : i32
    %c0_i32_1 = arith.constant 0 : i32
    return %c0_i32, %c0_i32_0 : i32, i32
  }
  func.func @transform_15(%arg0: i32) -> (i32, i32) {
    %c0_i32 = arith.constant 0 : i32
    %c0_i32_0 = arith.constant 0 : i32
    return %arg0, %c0_i32 : i32, i32
  }
  func.func @transform_16(%arg0: i32) -> (i32, i32, i32) {
    %c0_i32 = arith.constant 0 : i32
    %c0_i32_0 = arith.constant 0 : i32
    %c0_i32_1 = arith.constant 0 : i32
    return %arg0, %c0_i32, %c0_i32_0 : i32, i32, i32
  }
}

</mosaic_0001>

<llo_original>
// kernel: gat_embedding_forward.2
$region0: #{gat_embedding_forward.2}
  #allocation0 [shape = 'u32[]', space=smem, size = 0x4, offset = 0x4, fixed_abs, tag = 'smem constant byte address 0x4 - core index']
  #allocation1 [shape = 'u32[72,128]{1,0:T(1,128)}', space=vmem, size = 0x9000, scoped, tag = 'internal scratch']
  %s0 = inlined_call_operand.vmem [shape: bf16[8,256], index: 0, kind: input, shape index: {}]
  %s1 = inlined_call_operand.vmem [shape: bf16[256,32], index: 1, kind: input, shape index: {}]
  %s2 = inlined_call_operand.vmem [shape: f32[1,32], index: 2, kind: input, shape index: {}]
  %s3 = inlined_call_operand.vmem [shape: f32[8,32], index: 3, kind: output, shape index: {}]
  %s4 = sld [smem:[#allocation0]]
  $region30: #{gat_embedding_forward.2} parent=0
    _
  %s6 = ssub.s32 1, %s4
  %s7 = scalar_select 0, %s6, %s4
  // Predicated region
  $region2: #{gat_embedding_forward.2} parent=0 // pred_check
    _
  $region3: #{gat_embedding_forward.2} parent=0 // pred_check_branch
    %9 = sbr.rel (0) target = $region5
  $region4: #{gat_embedding_forward.2} parent=0 // pred_region
    _
  $region5: #{gat_embedding_forward.2} parent=0 // pred_fallthru
    _
  // Predicated region
  $region6: #{gat_embedding_forward.2} parent=0 // pred_check
    _
  $region7: #{gat_embedding_forward.2} parent=0 // pred_check_branch
    %11 = sbr.rel (0) target = $region9
  $region8: #{gat_embedding_forward.2} parent=0 // pred_region
    _
  $region9: #{gat_embedding_forward.2} parent=0 // pred_fallthru
    _
  // Predicated region
  $region10: #{gat_embedding_forward.2} parent=0 // pred_check
    _
  $region11: #{gat_embedding_forward.2} parent=0 // pred_check_branch
    %13 = sbr.rel (0) target = $region13
  $region12: #{gat_embedding_forward.2} parent=0 // pred_region
    _
  $region13: #{gat_embedding_forward.2} parent=0 // pred_fallthru
    _
  %p14 = scmp.eq.s32.totalorder 0, 0
  // Predicated region
  $region14: #{gat_embedding_forward.2} parent=0 // pred_check
    %p15 = pneg %p14
  $region15: #{gat_embedding_forward.2} parent=0 // pred_check_branch
    %17 = sbr.rel (%p15) target = $region17
  $region16: #{gat_embedding_forward.2} parent=0 // pred_region
    %vm18 = vcmask 261120
    %19 = vst.msk [vmem:[%s3] sm:$0xff] %vm18, 0.0
  $region17: #{gat_embedding_forward.2} parent=0 // pred_fallthru
    _
  %v20 = vld [vmem:[%s3] sm:$0xff]
  %v21 = vld [vmem:[%s0] sm:$0xff]
  %v22 = vld [vmem:[%s1] sm:$0xf]
  %v23 = vld [vmem:[%s1 + $0x4] sm:$0xf]
  %v24 = vld [vmem:[%s1 + $0x8] sm:$0xf]
  %v25 = vld [vmem:[%s1 + $0xc] sm:$0xf]
  %v26 = vld [vmem:[%s1 + $0x10] sm:$0xf]
  %v27 = vld [vmem:[%s1 + $0x14] sm:$0xf]
  %v28 = vld [vmem:[%s1 + $0x18] sm:$0xf]
  %v29 = vld [vmem:[%s1 + $0x1c] sm:$0xf]
  %v30 = vld [vmem:[%s1 + $0x20] sm:$0xf]
  %v31 = vld [vmem:[%s1 + $0x24] sm:$0xf]
  %v32 = vld [vmem:[%s1 + $0x28] sm:$0xf]
  %v33 = vld [vmem:[%s1 + $0x2c] sm:$0xf]
  %v34 = vld [vmem:[%s1 + $0x30] sm:$0xf]
  %v35 = vld [vmem:[%s1 + $0x34] sm:$0xf]
  %v36 = vld [vmem:[%s1 + $0x38] sm:$0xf]
  %v37 = vld [vmem:[%s1 + $0x3c] sm:$0xf]
  %v38 = vld [vmem:[%s1 + $0x40] sm:$0xf]
  %v39 = vld [vmem:[%s1 + $0x44] sm:$0xf]
  %v40 = vld [vmem:[%s1 + $0x48] sm:$0xf]
  %v41 = vld [vmem:[%s1 + $0x4c] sm:$0xf]
  %v42 = vld [vmem:[%s1 + $0x50] sm:$0xf]
  %v43 = vld [vmem:[%s1 + $0x54] sm:$0xf]
  %v44 = vld [vmem:[%s1 + $0x58] sm:$0xf]
  %v45 = vld [vmem:[%s1 + $0x5c] sm:$0xf]
  %v46 = vld [vmem:[%s1 + $0x60] sm:$0xf]
  %v47 = vld [vmem:[%s1 + $0x64] sm:$0xf]
  %v48 = vld [vmem:[%s1 + $0x68] sm:$0xf]
  %v49 = vld [vmem:[%s1 + $0x6c] sm:$0xf]
  %v50 = vld [vmem:[%s1 + $0x70] sm:$0xf]
  %v51 = vld [vmem:[%s1 + $0x74] sm:$0xf]
  %v52 = vld [vmem:[%s1 + $0x78] sm:$0xf]
  %v53 = vld [vmem:[%s1 + $0x7c] sm:$0xf]
  %v55 = vunpack.c.l.b16 %v21
  %v56 = vunpack.c.h.b16 %v21
  %v57 = vpack.c.b16 %v55, %v55
  %v58 = vpack.c.b16 %v56, %v56
  %v93 = vunpack.c.l.b16 %v22
  %v94 = vunpack.c.l.b16 %v23
  %v95 = vunpack.c.l.b16 %v24
  %v96 = vunpack.c.l.b16 %v25
  %v97 = vunpack.c.l.b16 %v26
  %v98 = vunpack.c.l.b16 %v27
  %v99 = vunpack.c.l.b16 %v28
  %v100 = vunpack.c.l.b16 %v29
  %v101 = vunpack.c.l.b16 %v30
  %v102 = vunpack.c.l.b16 %v31
  %v103 = vunpack.c.l.b16 %v32
  %v104 = vunpack.c.l.b16 %v33
  %v105 = vunpack.c.l.b16 %v34
  %v106 = vunpack.c.l.b16 %v35
  %v107 = vunpack.c.l.b16 %v36
  %v108 = vunpack.c.l.b16 %v37
  %v109 = vunpack.c.l.b16 %v38
  %v110 = vunpack.c.l.b16 %v39
  %v111 = vunpack.c.l.b16 %v40
  %v112 = vunpack.c.l.b16 %v41
  %v113 = vunpack.c.l.b16 %v42
  %v114 = vunpack.c.l.b16 %v43
  %v115 = vunpack.c.l.b16 %v44
  %v116 = vunpack.c.l.b16 %v45
  %v117 = vunpack.c.l.b16 %v46
  %v118 = vunpack.c.l.b16 %v47
  %v119 = vunpack.c.l.b16 %v48
  %v120 = vunpack.c.l.b16 %v49
  %v121 = vunpack.c.l.b16 %v50
  %v122 = vunpack.c.l.b16 %v51
  %v123 = vunpack.c.l.b16 %v52
  %v124 = vunpack.c.l.b16 %v53
  %v125 = vpack.c.b16 %v94, %v93
  %v126 = vpack.c.b16 %v96, %v95
  %v127 = vpack.c.b16 %v98, %v97
  %v128 = vpack.c.b16 %v100, %v99
  %v129 = vpack.c.b16 %v102, %v101
  %v130 = vpack.c.b16 %v104, %v103
  %v131 = vpack.c.b16 %v106, %v105
  %v132 = vpack.c.b16 %v108, %v107
  %v133 = vpack.c.b16 %v110, %v109
  %v134 = vpack.c.b16 %v112, %v111
  %v135 = vpack.c.b16 %v114, %v113
  %v136 = vpack.c.b16 %v116, %v115
  %v137 = vpack.c.b16 %v118, %v117
  %v138 = vpack.c.b16 %v120, %v119
  %v139 = vpack.c.b16 %v122, %v121
  %v140 = vpack.c.b16 %v124, %v123
  %157 = vmatpush.bf16.msra.mxu0 %v132
  %158 = vmatpush.bf16.msra.mxu0 %v131
  %159 = vmatpush.bf16.msra.mxu0 %v130
  %160 = vmatpush.bf16.msra.mxu0 %v129
  %161 = vmatpush.bf16.msra.mxu0 %v128
  %162 = vmatpush.bf16.msra.mxu0 %v127
  %163 = vmatpush.bf16.msra.mxu0 %v126
  %164 = vmatpush.bf16.msra.mxu0 %v125
  %165 = vmatmul.bf16.gmra.mxu0 %v57
  %v166 = vpop.f32.mrf.mxu0
  %v167 = vadd.f32 0.0, %v166
  %v168 = vpop.f32.mrf.mxu0
  %169 = vdwg.mxu0
  %170 = vmatpush.bf16.msra.mxu0 %v140
  %171 = vmatpush.bf16.msra.mxu0 %v139
  %172 = vmatpush.bf16.msra.mxu0 %v138
  %173 = vmatpush.bf16.msra.mxu0 %v137
  %174 = vmatpush.bf16.msra.mxu0 %v136
  %175 = vmatpush.bf16.msra.mxu0 %v135
  %176 = vmatpush.bf16.msra.mxu0 %v134
  %177 = vmatpush.bf16.msra.mxu0 %v133
  %178 = vmatmul.bf16.gmra.mxu0 %v58
  %v179 = vpop.f32.mrf.mxu0
  %v180 = vadd.f32 %v167, %v179
  %v181 = vpop.f32.mrf.mxu0
  %182 = vdwg.mxu0
  %v183 = vadd.f32 %v20, %v180
  %vm184 = vcmask 261120
  %185 = vst.msk [vmem:[%s3] sm:$0xff] %vm184, %v183
  // Predicated region
  $region18: #{gat_embedding_forward.2} parent=0 // pred_check
    %p186 = pneg %p14
  $region19: #{gat_embedding_forward.2} parent=0 // pred_check_branch
    %188 = sbr.rel (%p186) target = $region21
  $region20: #{gat_embedding_forward.2} parent=0 // pred_region
    %v189 = vld [vmem:[%s3] sm:$0xff]
    %v190 = vld [vmem:[%s2] sm:$0x1]
    %v192 = vperm.slane %v190, 0
    %v194 = vadd.f32 %v189, %v192
    %v195 = vmax.f32 %v194, 0.0
    %196 = vst.msk [vmem:[%s3] sm:$0xff] %vm184, %v195
  $region21: #{gat_embedding_forward.2} parent=0 // pred_fallthru
    _
  // Predicated region
  $region22: #{gat_embedding_forward.2} parent=0 // pred_check
    _
  $region23: #{gat_embedding_forward.2} parent=0 // pred_check_branch
    %198 = sbr.rel (0) target = $region25
  $region24: #{gat_embedding_forward.2} parent=0 // pred_region
    _
  $region25: #{gat_embedding_forward.2} parent=0 // pred_fallthru
    _
  // Predicated region
  $region26: #{gat_embedding_forward.2} parent=0 // pred_check
    _
  $region27: #{gat_embedding_forward.2} parent=0 // pred_check_branch
    %200 = sbr.rel (0) target = $region29
  $region28: #{gat_embedding_forward.2} parent=0 // pred_region
    _
  $region29: #{gat_embedding_forward.2} parent=0 // pred_fallthru
    _

// kernel: gat_embedding_forward.3
$region0: #{gat_embedding_forward.3}
  #allocation0 [shape = 'u32[]', space=smem, size = 0x4, offset = 0x4, fixed_abs, tag = 'smem constant byte address 0x4 - core index']
  #allocation1 [shape = 'u32[72,128]{1,0:T(1,128)}', space=vmem, size = 0x9000, scoped, tag = 'internal scratch']
  %s0 = inlined_call_operand.vmem [shape: f32[2,4,32], index: 0, kind: input, shape index: {}]
  %s1 = inlined_call_operand.vmem [shape: f32[2,9,32], index: 1, kind: input, shape index: {}]
  %s2 = inlined_call_operand.vmem [shape: f32[15,15], index: 2, kind: input, shape index: {}]
  %s3 = inlined_call_operand.vmem [shape: f32[32,32], index: 3, kind: input, shape index: {}]
  %s4 = inlined_call_operand.vmem [shape: f32[2,16], index: 4, kind: input, shape index: {}]
  %s5 = inlined_call_operand.vmem [shape: f32[2,16], index: 5, kind: input, shape index: {}]
  %s6 = inlined_call_operand.vmem [shape: f32[32,32], index: 6, kind: input, shape index: {}]
  %s7 = inlined_call_operand.vmem [shape: f32[1,32], index: 7, kind: input, shape index: {}]
  %s8 = inlined_call_operand.vmem [shape: f32[1,32], index: 8, kind: input, shape index: {}]
  %s9 = inlined_call_operand.vmem [shape: f32[32,64], index: 9, kind: input, shape index: {}]
  %s10 = inlined_call_operand.vmem [shape: f32[1,64], index: 10, kind: input, shape index: {}]
  %s11 = inlined_call_operand.vmem [shape: f32[64,2], index: 11, kind: input, shape index: {}]
  %s12 = inlined_call_operand.vmem [shape: f32[1,2], index: 12, kind: input, shape index: {}]
  %s13 = inlined_call_operand.vmem [shape: f32[32,2], index: 13, kind: input, shape index: {}]
  %s14 = inlined_call_operand.vmem [shape: f32[1,2], index: 14, kind: input, shape index: {}]
  %s15 = inlined_call_operand.vmem [shape: f32[2,128], index: 15, kind: output, shape index: {0}]
  %s16 = inlined_call_operand.vmem [shape: f32[2,15,128], index: 16, kind: output, shape index: {1}]
  %17 = xla_tuple %s15, %s16
  %s18 = sld [smem:[#allocation0]]
  $region78: #{gat_embedding_forward.3} parent=0
    _
  %s20 = ssub.s32 1, %s18
  %s21 = scalar_select 0, %s20, %s18
  // Predicated region
  $region2: #{gat_embedding_forward.3} parent=0 // pred_check
    _
  $region3: #{gat_embedding_forward.3} parent=0 // pred_check_branch
    %23 = sbr.rel (0) target = $region5
  $region4: #{gat_embedding_forward.3} parent=0 // pred_region
    _
  $region5: #{gat_embedding_forward.3} parent=0 // pred_fallthru
    _
  // Predicated region
  $region6: #{gat_embedding_forward.3} parent=0 // pred_check
    _
  $region7: #{gat_embedding_forward.3} parent=0 // pred_check_branch
    %25 = sbr.rel (0) target = $region9
  $region8: #{gat_embedding_forward.3} parent=0 // pred_region
    _
  $region9: #{gat_embedding_forward.3} parent=0 // pred_fallthru
    _
  // Predicated region
  $region10: #{gat_embedding_forward.3} parent=0 // pred_check
    _
  $region11: #{gat_embedding_forward.3} parent=0 // pred_check_branch
    %27 = sbr.rel (0) target = $region13
  $region12: #{gat_embedding_forward.3} parent=0 // pred_region
    _
  $region13: #{gat_embedding_forward.3} parent=0 // pred_fallthru
    _
  // Predicated region
  $region14: #{gat_embedding_forward.3} parent=0 // pred_check
    _
  $region15: #{gat_embedding_forward.3} parent=0 // pred_check_branch
    %29 = sbr.rel (0) target = $region17
  $region16: #{gat_embedding_forward.3} parent=0 // pred_region
    _
  $region17: #{gat_embedding_forward.3} parent=0 // pred_fallthru
    _
  // Predicated region
  $region18: #{gat_embedding_forward.3} parent=0 // pred_check
    _
  $region19: #{gat_embedding_forward.3} parent=0 // pred_check_branch
    %31 = sbr.rel (0) target = $region21
  $region20: #{gat_embedding_forward.3} parent=0 // pred_region
    _
  $region21: #{gat_embedding_forward.3} parent=0 // pred_fallthru
    _
  // Predicated region
  $region22: #{gat_embedding_forward.3} parent=0 // pred_check
    _
  $region23: #{gat_embedding_forward.3} parent=0 // pred_check_branch
    %33 = sbr.rel (0) target = $region25
  $region24: #{gat_embedding_forward.3} parent=0 // pred_region
    _
  $region25: #{gat_embedding_forward.3} parent=0 // pred_fallthru
    _
  // Predicated region
  $region26: #{gat_embedding_forward.3} parent=0 // pred_check
    _
  $region27: #{gat_embedding_forward.3} parent=0 // pred_check_branch
    %35 = sbr.rel (0) target = $region29
  $region28: #{gat_embedding_forward.3} parent=0 // pred_region
    _
  $region29: #{gat_embedding_forward.3} parent=0 // pred_fallthru
    _
  // Predicated region
  $region30: #{gat_embedding_forward.3} parent=0 // pred_check
    _
  $region31: #{gat_embedding_forward.3} parent=0 // pred_check_branch
    %37 = sbr.rel (0) target = $region33
  $region32: #{gat_embedding_forward.3} parent=0 // pred_region
    _
  $region33: #{gat_embedding_forward.3} parent=0 // pred_fallthru
    _
  // Predicated region
  $region34: #{gat_embedding_forward.3} parent=0 // pred_check
    _
  $region35: #{gat_embedding_forward.3} parent=0 // pred_check_branch
    %39 = sbr.rel (0) target = $region37
  $region36: #{gat_embedding_forward.3} parent=0 // pred_region
    _
  $region37: #{gat_embedding_forward.3} parent=0 // pred_fallthru
    _
  // Predicated region
  $region38: #{gat_embedding_forward.3} parent=0 // pred_check
    _
  $region39: #{gat_embedding_forward.3} parent=0 // pred_check_branch
    %41 = sbr.rel (0) target = $region41
  $region40: #{gat_embedding_forward.3} parent=0 // pred_region
    _
  $region41: #{gat_embedding_forward.3} parent=0 // pred_fallthru
    _
  // Predicated region
  $region42: #{gat_embedding_forward.3} parent=0 // pred_check
    _
  $region43: #{gat_embedding_forward.3} parent=0 // pred_check_branch
    %43 = sbr.rel (0) target = $region45
  $region44: #{gat_embedding_forward.3} parent=0 // pred_region
    _
  $region45: #{gat_embedding_forward.3} parent=0 // pred_fallthru
    _
  // Predicated region
  $region46: #{gat_embedding_forward.3} parent=0 // pred_check
    _
  $region47: #{gat_embedding_forward.3} parent=0 // pred_check_branch
    %45 = sbr.rel (0) target = $region49
  $region48: #{gat_embedding_forward.3} parent=0 // pred_region
    _
  $region49: #{gat_embedding_forward.3} parent=0 // pred_fallthru
    _
  // Predicated region
  $region50: #{gat_embedding_forward.3} parent=0 // pred_check
    _
  $region51: #{gat_embedding_forward.3} parent=0 // pred_check_branch
    %47 = sbr.rel (0) target = $region53
  $region52: #{gat_embedding_forward.3} parent=0 // pred_region
    _
  $region53: #{gat_embedding_forward.3} parent=0 // pred_fallthru
    _
  // Predicated region
  $region54: #{gat_embedding_forward.3} parent=0 // pred_check
    _
  $region55: #{gat_embedding_forward.3} parent=0 // pred_check_branch
    %49 = sbr.rel (0) target = $region57
  $region56: #{gat_embedding_forward.3} parent=0 // pred_region
    _
  $region57: #{gat_embedding_forward.3} parent=0 // pred_fallthru
    _
  // Predicated region
  $region58: #{gat_embedding_forward.3} parent=0 // pred_check
    _
  $region59: #{gat_embedding_forward.3} parent=0 // pred_check_branch
    %51 = sbr.rel (0) target = $region61
  $region60: #{gat_embedding_forward.3} parent=0 // pred_region
    _
  $region61: #{gat_embedding_forward.3} parent=0 // pred_fallthru
    _
  %v53 = vld [vmem:[%s2] sm:$0xff]
  %v54 = vld [vmem:[%s2 + $0x8] sm:$0x7f]
  %v55 = vld [vmem:[%s0] sm:$0xf]
  %v56 = vld [vmem:[%s0 + $0x4] sm:$0xf]
  %v57 = vld [vmem:[%s1] sm:$0xff]
  %v58 = vld [vmem:[%s1 + $0x8] sm:$0x1]
  %v59 = vld [vmem:[%s1 + $0x10] sm:$0xff]
  %v60 = vld [vmem:[%s1 + $0x18] sm:$0x1]
  %v62 = vrot.slane %v55, 6
  %vm66 = vcmask 1045504
  %v67 = vrot.slane %v57, 2
  %v68 = vrot.slane %v58, 2
  %v69 = vsel %vm66, %v67, %v68
  %v73 = vrot.slane %v56, 7
  %vm77 = vcmask 1044480
  %v78 = vrot.slane %v59, 3
  %v79 = vrot.slane %v60, 3
  %v80 = vsel %vm77, %v78, %v79
  %vm83 = vcmask 1041408
  %v84 = vsel %vm83, 0.0, %v62
  %v85 = vsel %vm66, %v84, %v67
  %vm86 = vcmask 1046528
  %v87 = vsel %vm86, %v69, 0.0
  %vm88 = vcmask 1040384
  %v89 = vsel %vm88, 0.0, %v73
  %v90 = vsel %vm77, %v89, %v78
  %v91 = vld [vmem:[%s3] sm:$0xff]
  %v92 = vld [vmem:[%s3 + $0x8] sm:$0xff]
  %v93 = vld [vmem:[%s3 + $0x10] sm:$0xff]
  %v94 = vld [vmem:[%s3 + $0x18] sm:$0xff]
  %v95 = vpack.c.bf16 %v87, %v85
  %v96 = vpack.c.bf16 %v80, %v90
  %v97 = vpack.c.bf16 %v92, %v91
  %v98 = vpack.c.bf16 %v94, %v93
  %vm99 = vcmask 261120
  %v101 = vsel %vm99, %v95, 0
  %v104 = vsel %vm99, %v96, 0
  %106 = vmatpush.bf16.msra.mxu0 0
  %107 = vmatpush.bf16.msra.mxu0 0
  %108 = vmatpush.bf16.msra.mxu0 0
  %109 = vmatpush.bf16.msra.mxu0 0
  %110 = vmatpush.bf16.msra.mxu0 0
  %111 = vmatpush.bf16.msra.mxu0 0
  %112 = vmatpush.bf16.msra.mxu0 %v98
  %113 = vmatpush.bf16.msra.mxu0 %v97
  %114 = vmatmul.bf16.gmra.mxu0 %v101
  %v115 = vpop.f32.mrf.mxu0
  %v116 = vadd.f32 0.0, %v115
  %v117 = vpop.f32.mrf.mxu0
  %v118 = vadd.f32 0.0, %v117
  %119 = vmatmul.bf16.gmra.mxu0 %v104
  %v120 = vpop.f32.mrf.mxu0
  %v121 = vadd.f32 0.0, %v120
  %v122 = vpop.f32.mrf.mxu0
  %v123 = vadd.f32 0.0, %v122
  %124 = vdwg.mxu0
  %v125 = vld [vmem:[%s4] sm:$0x3]
  %v126 = vld [vmem:[%s5] sm:$0x3]
  %v127 = vperm.slane %v125, 0
  %v128 = vmul.f32 %v116, %v127
  %v129 = vmul.f32 %v118, %v127
  %vm130 = vcmask 130048
  %v131 = vsel %vm130, %v128, 0.0
  %132 = vadd.xlane.f32.xlu0 %v131
  %v133 = vpop.xlane.xlu0 %132
  %vm134 = vcmask 129024
  %v135 = vsel %vm134, %v129, 0.0
  %136 = vadd.xlane.f32.xlu0 %v135
  %v137 = vpop.xlane.xlu0 %136
  %v139 = vsel %vm130, %v126, 0
  %v142 = vsel %vm130, %v116, 0
  %v145 = vsel %vm130, %v118, 0
  %147 = vmatpush.xpose.msra.mxu0 0.0
  %148 = vmatpush.xpose.msra.mxu0 0.0
  %149 = vmatpush.xpose.msra.mxu0 0.0
  %150 = vmatpush.xpose.msra.mxu0 0.0
  %151 = vmatpush.xpose.msra.mxu0 0.0
  %152 = vmatpush.xpose.msra.mxu0 0.0
  %153 = vmatpush.xpose.msra.mxu0 0.0
  %154 = vmatpush.xpose.msra.mxu0 0.0
  %155 = vmatpush.xpose.msra.mxu0 0.0
  %156 = vmatpush.xpose.msra.mxu0 0.0
  %157 = vmatpush.xpose.msra.mxu0 0.0
  %158 = vmatpush.xpose.msra.mxu0 0.0
  %159 = vmatpush.xpose.msra.mxu0 0.0
  %160 = vmatpush.xpose.msra.mxu0 0.0
  %161 = vmatpush.xpose.msra.mxu0 %v145
  %162 = vmatpush.xpose.msra.mxu0 %v142
  %163 = vmatmul.f32.gmra.mxu0 %v139
  %v164 = vpop.f32.mrf.mxu0
  %v165 = vadd.f32 0.0, %v164
  %166 = vdwg.mxu0
  %v167 = vperm.slane %v165, 0
  %v168 = vadd.f32 %v133, %v167
  %v169 = vadd.f32 %v137, %v167
  %vm170 = vcmp.gt.f32.partialorder %v168, 0.0
  %vm171 = vcmp.gt.f32.partialorder %v169, 0.0
  %v172 = vmul.f32 %v168, 0.2
  %v173 = vmul.f32 %v169, 0.2
  %v174 = vsel %vm170, %v168, %v172
  %v175 = vsel %vm171, %v169, %v173
  %v176 = vadd.f32 %v174, %v53
  %v177 = vadd.f32 %v175, %v54
  %vm178 = vcmask 121856
  %v179 = vsel %vm178, %v176, -inf
  %180 = vmax.xlane.f32.xlu0 %v179
  %v181 = vpop.xlane.xlu0 %180
  %vm182 = vcmask 120832
  %v183 = vsel %vm182, %v177, -inf
  %184 = vmax.xlane.f32.xlu0 %v183
  %v185 = vpop.xlane.xlu0 %184
  %v186 = vsub.f32 %v176, %v181
  %v187 = vsub.f32 %v177, %v185
  %v188 = vmul.f32 %v186, 1.442695
  %v189 = vpow.pop %v188
  %v190 = vmul.f32 %v187, 1.442695
  %v191 = vpow.pop %v190
  %v192 = vsel %vm178, %v189, 0.0
  %193 = vadd.xlane.f32.xlu0 %v192
  %v194 = vpop.xlane.xlu0 %193
  %v195 = vsel %vm182, %v191, 0.0
  %196 = vadd.xlane.f32.xlu0 %v195
  %v197 = vpop.xlane.xlu0 %196
  %v198 = vrcp.pop %v194
  %v199 = vmul.f32 %v194, %v198
  %v200 = vsub.f32 1.0, %v199
  %v201 = vmul.f32 %v198, %v200
  %v202 = vadd.f32 %v198, %v201
  %vm203 = vweird.f32 %v194
  %vm204 = vweird.f32 %v198
  %vm205 = vmor %vm203, %vm204
  %v206 = vsel %vm205, %v198, %v202
  %v207 = vand.u32 2147483647, %v194
  %vm208 = vcmp.eq.f32.partialorder %v207, 8.507059e+37
  %v209 = vand.u32 %v194, 2147483648
  %v210 = vor.u32 1.1754944e-38, %v209
  %v211 = vsel %vm208, %v210, %v206
  %v212 = vmul.f32 %v189, %v211
  %v213 = vrcp.pop %v197
  %v214 = vmul.f32 %v197, %v213
  %v215 = vsub.f32 1.0, %v214
  %v216 = vmul.f32 %v213, %v215
  %v217 = vadd.f32 %v213, %v216
  %vm218 = vweird.f32 %v197
  %vm219 = vweird.f32 %v213
  %vm220 = vmor %vm218, %vm219
  %v221 = vsel %vm220, %v213, %v217
  %v222 = vand.u32 2147483647, %v197
  %vm223 = vcmp.eq.f32.partialorder %v222, 8.507059e+37
  %v224 = vand.u32 %v197, 2147483648
  %v225 = vor.u32 1.1754944e-38, %v224
  %v226 = vsel %vm223, %v225, %v221
  %v227 = vmul.f32 %v191, %v226
  %v229 = vsel %vm178, %v212, 0
  %v232 = vsel %vm178, %v227, 0
  %v234 = vsel %vm86, %v118, 0
  %236 = vmatpush.msra.mxu0 0.0
  %237 = vmatpush.msra.mxu0 0.0
  %238 = vmatpush.msra.mxu0 0.0
  %239 = vmatpush.msra.mxu0 0.0
  %240 = vmatpush.msra.mxu0 0.0
  %241 = vmatpush.msra.mxu0 0.0
  %242 = vmatpush.msra.mxu0 0.0
  %243 = vmatpush.msra.mxu0 0.0
  %244 = vmatpush.msra.mxu0 0.0
  %245 = vmatpush.msra.mxu0 0.0
  %246 = vmatpush.msra.mxu0 0.0
  %247 = vmatpush.msra.mxu0 0.0
  %248 = vmatpush.msra.mxu0 0.0
  %249 = vmatpush.msra.mxu0 0.0
  %250 = vmatpush.msra.mxu0 %v234
  %251 = vmatpush.msra.mxu0 %v116
  %252 = vmatmul.f32.gmra.mxu0 %v229
  %v253 = vpop.f32.mrf.mxu0
  %v254 = vadd.f32 0.0, %v253
  %255 = vmatmul.f32.gmra.mxu0 %v232
  %v256 = vpop.f32.mrf.mxu0
  %v257 = vadd.f32 0.0, %v256
  %258 = vdwg.mxu0
  %vm259 = vcmp.gt.f32.partialorder %v254, 0.0
  %vm260 = vcmp.gt.f32.partialorder %v257, 0.0
  %v261 = vmin.f32 %v254, 0.0
  %v262 = vmin.f32 %v257, 0.0
  %v263 = vmul.f32 %v261, 1.442695
  %v264 = vpow.pop %v263
  %v265 = vmul.f32 %v262, 1.442695
  %v266 = vpow.pop %v265
  %v267 = vsub.f32 %v264, 1.0
  %v268 = vsub.f32 %v266, 1.0
  %v269 = vsel %vm259, %v254, %v267
  %v270 = vsel %vm260, %v257, %v268
  %v271 = vadd.f32 %v212, 0.0
  %v272 = vadd.f32 %v227, 0.0
  %v273 = vperm.slane %v125, 1
  %275 = vrot.lane.b32.xlu0 %v273, 16
  %v276 = vpop.permute.xlu0 %275
  %v278 = vmul.f32 %v116, %v276
  %v279 = vmul.f32 %v118, %v276
  %282 = vrot.lane.b32.xlu0 %v278, 112
  %v283 = vpop.permute.xlu0 %282
  %284 = vrot.lane.b32.xlu0 %v279, 112
  %v285 = vpop.permute.xlu0 %284
  %v288 = vsel %vm130, %v283, 0.0
  %289 = vadd.xlane.f32.xlu0 %v288
  %v290 = vpop.xlane.xlu0 %289
  %v291 = vsel %vm134, %v285, 0.0
  %292 = vadd.xlane.f32.xlu0 %v291
  %v293 = vpop.xlane.xlu0 %292
  %v294 = vrot.slane %v126, 1
  %295 = vrot.lane.b32.xlu0 %v116, 112
  %v296 = vpop.permute.xlu0 %295
  %297 = vrot.lane.b32.xlu0 %v118, 112
  %v298 = vpop.permute.xlu0 %297
  %v299 = vsel %vm130, %v294, 0
  %v301 = vsel %vm130, %v296, 0
  %v303 = vsel %vm130, %v298, 0
  %305 = vmatpush.xpose.msra.mxu0 0.0
  %306 = vmatpush.xpose.msra.mxu0 0.0
  %307 = vmatpush.xpose.msra.mxu0 0.0
  %308 = vmatpush.xpose.msra.mxu0 0.0
  %309 = vmatpush.xpose.msra.mxu0 0.0
  %310 = vmatpush.xpose.msra.mxu0 0.0
  %311 = vmatpush.xpose.msra.mxu0 0.0
  %312 = vmatpush.xpose.msra.mxu0 0.0
  %313 = vmatpush.xpose.msra.mxu0 0.0
  %314 = vmatpush.xpose.msra.mxu0 0.0
  %315 = vmatpush.xpose.msra.mxu0 0.0
  %316 = vmatpush.xpose.msra.mxu0 0.0
  %317 = vmatpush.xpose.msra.mxu0 0.0
  %318 = vmatpush.xpose.msra.mxu0 0.0
  %319 = vmatpush.xpose.msra.mxu0 %v303
  %320 = vmatpush.xpose.msra.mxu0 %v301
  %321 = vmatmul.f32.gmra.mxu0 %v299
  %v322 = vpop.f32.mrf.mxu0
  %v323 = vadd.f32 0.0, %v322
  %324 = vdwg.mxu0
  %v325 = vperm.slane %v323, 0
  %v326 = vadd.f32 %v290, %v325
  %v327 = vadd.f32 %v293, %v325
  %vm328 = vcmp.gt.f32.partialorder %v326, 0.0
  %vm329 = vcmp.gt.f32.partialorder %v327, 0.0
  %v330 = vmul.f32 %v326, 0.2
  %v331 = vmul.f32 %v327, 0.2
  %v332 = vsel %vm328, %v326, %v330
  %v333 = vsel %vm329, %v327, %v331
  %v334 = vadd.f32 %v332, %v53
  %v335 = vadd.f32 %v333, %v54
  %v336 = vsel %vm178, %v334, -inf
  %337 = vmax.xlane.f32.xlu0 %v336
  %v338 = vpop.xlane.xlu0 %337
  %v339 = vsel %vm182, %v335, -inf
  %340 = vmax.xlane.f32.xlu0 %v339
  %v341 = vpop.xlane.xlu0 %340
  %v342 = vsub.f32 %v334, %v338
  %v343 = vsub.f32 %v335, %v341
  %v344 = vmul.f32 %v342, 1.442695
  %v345 = vpow.pop %v344
  %v346 = vmul.f32 %v343, 1.442695
  %v347 = vpow.pop %v346
  %v348 = vsel %vm178, %v345, 0.0
  %349 = vadd.xlane.f32.xlu0 %v348
  %v350 = vpop.xlane.xlu0 %349
  %v351 = vsel %vm182, %v347, 0.0
  %352 = vadd.xlane.f32.xlu0 %v351
  %v353 = vpop.xlane.xlu0 %352
  %v354 = vrcp.pop %v350
  %v355 = vmul.f32 %v350, %v354
  %v356 = vsub.f32 1.0, %v355
  %v357 = vmul.f32 %v354, %v356
  %v358 = vadd.f32 %v354, %v357
  %vm359 = vweird.f32 %v350
  %vm360 = vweird.f32 %v354
  %vm361 = vmor %vm359, %vm360
  %v362 = vsel %vm361, %v354, %v358
  %v363 = vand.u32 2147483647, %v350
  %vm364 = vcmp.eq.f32.partialorder %v363, 8.507059e+37
  %v365 = vand.u32 %v350, 2147483648
  %v366 = vor.u32 1.1754944e-38, %v365
  %v367 = vsel %vm364, %v366, %v362
  %v368 = vmul.f32 %v345, %v367
  %v369 = vrcp.pop %v353
  %v370 = vmul.f32 %v353, %v369
  %v371 = vsub.f32 1.0, %v370
  %v372 = vmul.f32 %v369, %v371
  %v373 = vadd.f32 %v369, %v372
  %vm374 = vweird.f32 %v353
  %vm375 = vweird.f32 %v369
  %vm376 = vmor %vm374, %vm375
  %v377 = vsel %vm376, %v369, %v373
  %v378 = vand.u32 2147483647, %v353
  %vm379 = vcmp.eq.f32.partialorder %v378, 8.507059e+37
  %v380 = vand.u32 %v353, 2147483648
  %v381 = vor.u32 1.1754944e-38, %v380
  %v382 = vsel %vm379, %v381, %v377
  %v383 = vmul.f32 %v347, %v382
  %v386 = vsel %vm178, %v368, 0
  %v389 = vsel %vm178, %v383, 0
  %v391 = vsel %vm86, %v298, 0
  %393 = vmatpush.msra.mxu0 0.0
  %394 = vmatpush.msra.mxu0 0.0
  %395 = vmatpush.msra.mxu0 0.0
  %396 = vmatpush.msra.mxu0 0.0
  %397 = vmatpush.msra.mxu0 0.0
  %398 = vmatpush.msra.mxu0 0.0
  %399 = vmatpush.msra.mxu0 0.0
  %400 = vmatpush.msra.mxu0 0.0
  %401 = vmatpush.msra.mxu0 0.0
  %402 = vmatpush.msra.mxu0 0.0
  %403 = vmatpush.msra.mxu0 0.0
  %404 = vmatpush.msra.mxu0 0.0
  %405 = vmatpush.msra.mxu0 0.0
  %406 = vmatpush.msra.mxu0 0.0
  %407 = vmatpush.msra.mxu0 %v391
  %408 = vmatpush.msra.mxu0 %v296
  %409 = vmatmul.f32.gmra.mxu0 %v386
  %v410 = vpop.f32.mrf.mxu0
  %v411 = vadd.f32 0.0, %v410
  %412 = vmatmul.f32.gmra.mxu0 %v389
  %v413 = vpop.f32.mrf.mxu0
  %v414 = vadd.f32 0.0, %v413
  %415 = vdwg.mxu0
  %vm416 = vcmp.gt.f32.partialorder %v411, 0.0
  %vm417 = vcmp.gt.f32.partialorder %v414, 0.0
  %v418 = vmin.f32 %v411, 0.0
  %v419 = vmin.f32 %v414, 0.0
  %v420 = vmul.f32 %v418, 1.442695
  %v421 = vpow.pop %v420
  %v422 = vmul.f32 %v419, 1.442695
  %v423 = vpow.pop %v422
  %v424 = vsub.f32 %v421, 1.0
  %v425 = vsub.f32 %v423, 1.0
  %v426 = vsel %vm416, %v411, %v424
  %v427 = vsel %vm417, %v414, %v425
  %v428 = vadd.f32 %v271, %v368
  %v429 = vadd.f32 %v272, %v383
  %432 = vrot.lane.b32.xlu0 %v426, 16
  %v433 = vpop.permute.xlu0 %432
  %434 = vrot.lane.b32.xlu0 %v427, 16
  %v435 = vpop.permute.xlu0 %434
  %v438 = vsel %vm130, %v269, %v433
  %v439 = vsel %vm130, %v270, %v435
  %v440 = vmul.f32 %v428, 0.5
  %v441 = vmul.f32 %v429, 0.5
  %v442 = vsel %vm178, %v440, 0.0
  %v443 = vsel %vm178, %v441, 0.0
  %444 = vst [vmem:[%s16] sm:$0xff] %v442
  %445 = vst [vmem:[%s16 + $0x8] sm:$0x7f] %v443
  %v446 = vmul.f32 %v121, %v127
  %v447 = vmul.f32 %v123, %v127
  %vm448 = vcmask 130055
  %v449 = vsel %vm448, %v129, 0.0
  %450 = vadd.xlane.f32.xlu0 %v449
  %v451 = vpop.xlane.xlu0 %450
  %v452 = vsel %vm130, %v446, 0.0
  %453 = vadd.xlane.f32.xlu0 %v452
  %v454 = vpop.xlane.xlu0 %453
  %vm455 = vcmask 128000
  %v456 = vsel %vm455, %v447, 0.0
  %457 = vadd.xlane.f32.xlu0 %v456
  %v458 = vpop.xlane.xlu0 %457
  %v461 = vrot.slane %v118, 7
  %v462 = vrot.slane %v121, 7
  %v463 = vsel %vm88, %v461, %v462
  %v464 = vrot.slane %v123, 7
  %v465 = vsel %vm88, %v462, %v464
  %v466 = vsel %vm130, %v463, 0
  %v468 = vsel %vm130, %v465, 0
  %470 = vmatpush.xpose.msra.mxu0 0.0
  %471 = vmatpush.xpose.msra.mxu0 0.0
  %472 = vmatpush.xpose.msra.mxu0 0.0
  %473 = vmatpush.xpose.msra.mxu0 0.0
  %474 = vmatpush.xpose.msra.mxu0 0.0
  %475 = vmatpush.xpose.msra.mxu0 0.0
  %476 = vmatpush.xpose.msra.mxu0 0.0
  %477 = vmatpush.xpose.msra.mxu0 0.0
  %478 = vmatpush.xpose.msra.mxu0 0.0
  %479 = vmatpush.xpose.msra.mxu0 0.0
  %480 = vmatpush.xpose.msra.mxu0 0.0
  %481 = vmatpush.xpose.msra.mxu0 0.0
  %482 = vmatpush.xpose.msra.mxu0 0.0
  %483 = vmatpush.xpose.msra.mxu0 0.0
  %484 = vmatpush.xpose.msra.mxu0 %v468
  %485 = vmatpush.xpose.msra.mxu0 %v466
  %486 = vmatmul.f32.gmra.mxu0 %v139
  %v487 = vpop.f32.mrf.mxu0
  %v488 = vadd.f32 0.0, %v487
  %489 = vdwg.mxu0
  %v490 = vperm.slane %v488, 0
  %v491 = vadd.f32 %v451, %v490
  %v492 = vadd.f32 %v454, %v490
  %v493 = vadd.f32 %v458, %v490
  %vm494 = vcmp.gt.f32.partialorder %v491, 0.0
  %vm495 = vcmp.gt.f32.partialorder %v492, 0.0
  %vm496 = vcmp.gt.f32.partialorder %v493, 0.0
  %v497 = vmul.f32 %v491, 0.2
  %v498 = vmul.f32 %v492, 0.2
  %v499 = vmul.f32 %v493, 0.2
  %v500 = vsel %vm494, %v491, %v497
  %v501 = vsel %vm495, %v492, %v498
  %v502 = vsel %vm496, %v493, %v499
  %v505 = vrot.slane %v53, 1
  %v506 = vrot.slane %v54, 1
  %v507 = vsel %vm86, %v505, %v506
  %v511 = vadd.f32 %v500, %v505
  %v512 = vadd.f32 %v501, %v507
  %v513 = vadd.f32 %v502, %v506
  %vm514 = vcmask 121863
  %v515 = vsel %vm514, %v511, -inf
  %516 = vmax.xlane.f32.xlu0 %v515
  %v517 = vpop.xlane.xlu0 %516
  %v518 = vsel %vm178, %v512, -inf
  %519 = vmax.xlane.f32.xlu0 %v518
  %v520 = vpop.xlane.xlu0 %519
  %vm521 = vcmask 119808
  %v522 = vsel %vm521, %v513, -inf
  %523 = vmax.xlane.f32.xlu0 %v522
  %v524 = vpop.xlane.xlu0 %523
  %v525 = vsub.f32 %v511, %v517
  %v526 = vsub.f32 %v512, %v520
  %v527 = vsub.f32 %v513, %v524
  %v528 = vmul.f32 %v525, 1.442695
  %v529 = vpow.pop %v528
  %v530 = vmul.f32 %v526, 1.442695
  %v531 = vpow.pop %v530
  %v532 = vmul.f32 %v527, 1.442695
  %v533 = vpow.pop %v532
  %v534 = vsel %vm514, %v529, 0.0
  %535 = vadd.xlane.f32.xlu0 %v534
  %v536 = vpop.xlane.xlu0 %535
  %v537 = vsel %vm178, %v531, 0.0
  %538 = vadd.xlane.f32.xlu0 %v537
  %v539 = vpop.xlane.xlu0 %538
  %v540 = vsel %vm521, %v533, 0.0
  %541 = vadd.xlane.f32.xlu0 %v540
  %v542 = vpop.xlane.xlu0 %541
  %v543 = vrcp.pop %v536
  %v544 = vmul.f32 %v536, %v543
  %v545 = vsub.f32 1.0, %v544
  %v546 = vmul.f32 %v543, %v545
  %v547 = vadd.f32 %v543, %v546
  %vm548 = vweird.f32 %v536
  %vm549 = vweird.f32 %v543
  %vm550 = vmor %vm548, %vm549
  %v551 = vsel %vm550, %v543, %v547
  %v552 = vand.u32 2147483647, %v536
  %vm553 = vcmp.eq.f32.partialorder %v552, 8.507059e+37
  %v554 = vand.u32 %v536, 2147483648
  %v555 = vor.u32 1.1754944e-38, %v554
  %v556 = vsel %vm553, %v555, %v551
  %v557 = vmul.f32 %v529, %v556
  %v558 = vrcp.pop %v539
  %v559 = vmul.f32 %v539, %v558
  %v560 = vsub.f32 1.0, %v559
  %v561 = vmul.f32 %v558, %v560
  %v562 = vadd.f32 %v558, %v561
  %vm563 = vweird.f32 %v539
  %vm564 = vweird.f32 %v558
  %vm565 = vmor %vm563, %vm564
  %v566 = vsel %vm565, %v558, %v562
  %v567 = vand.u32 2147483647, %v539
  %vm568 = vcmp.eq.f32.partialorder %v567, 8.507059e+37
  %v569 = vand.u32 %v539, 2147483648
  %v570 = vor.u32 1.1754944e-38, %v569
  %v571 = vsel %vm568, %v570, %v566
  %v572 = vmul.f32 %v531, %v571
  %v573 = vrcp.pop %v542
  %v574 = vmul.f32 %v542, %v573
  %v575 = vsub.f32 1.0, %v574
  %v576 = vmul.f32 %v573, %v575
  %v577 = vadd.f32 %v573, %v576
  %vm578 = vweird.f32 %v542
  %vm579 = vweird.f32 %v573
  %vm580 = vmor %vm578, %vm579
  %v581 = vsel %vm580, %v573, %v577
  %v582 = vand.u32 2147483647, %v542
  %vm583 = vcmp.eq.f32.partialorder %v582, 8.507059e+37
  %v584 = vand.u32 %v542, 2147483648
  %v585 = vor.u32 1.1754944e-38, %v584
  %v586 = vsel %vm583, %v585, %v581
  %v587 = vmul.f32 %v533, %v586
  %v591 = vrot.slane %v557, 7
  %v592 = vrot.slane %v572, 7
  %v593 = vsel %vm88, %v591, %v592
  %v594 = vrot.slane %v587, 7
  %v595 = vsel %vm88, %v592, %v594
  %v597 = vsel %vm178, %v593, 0
  %v599 = vsel %vm178, %v595, 0
  %v601 = vsel %vm86, %v465, 0
  %603 = vmatpush.msra.mxu0 0.0
  %604 = vmatpush.msra.mxu0 0.0
  %605 = vmatpush.msra.mxu0 0.0
  %606 = vmatpush.msra.mxu0 0.0
  %607 = vmatpush.msra.mxu0 0.0
  %608 = vmatpush.msra.mxu0 0.0
  %609 = vmatpush.msra.mxu0 0.0
  %610 = vmatpush.msra.mxu0 0.0
  %611 = vmatpush.msra.mxu0 0.0
  %612 = vmatpush.msra.mxu0 0.0
  %613 = vmatpush.msra.mxu0 0.0
  %614 = vmatpush.msra.mxu0 0.0
  %615 = vmatpush.msra.mxu0 0.0
  %616 = vmatpush.msra.mxu0 0.0
  %617 = vmatpush.msra.mxu0 %v601
  %618 = vmatpush.msra.mxu0 %v463
  %619 = vmatmul.f32.gmra.mxu0 %v597
  %v620 = vpop.f32.mrf.mxu0
  %v621 = vadd.f32 0.0, %v620
  %622 = vmatmul.f32.gmra.mxu0 %v599
  %v623 = vpop.f32.mrf.mxu0
  %v624 = vadd.f32 0.0, %v623
  %625 = vdwg.mxu0
  %vm626 = vcmp.gt.f32.partialorder %v621, 0.0
  %vm627 = vcmp.gt.f32.partialorder %v624, 0.0
  %v628 = vmin.f32 %v621, 0.0
  %v629 = vmin.f32 %v624, 0.0
  %v630 = vmul.f32 %v628, 1.442695
  %v631 = vpow.pop %v630
  %v632 = vmul.f32 %v629, 1.442695
  %v633 = vpow.pop %v632
  %v634 = vsub.f32 %v631, 1.0
  %v635 = vsub.f32 %v633, 1.0
  %v636 = vsel %vm626, %v621, %v634
  %v637 = vsel %vm627, %v624, %v635
  %v638 = vadd.f32 %v557, 0.0
  %v639 = vadd.f32 %v572, 0.0
  %v640 = vadd.f32 %v587, 0.0
  %v641 = vmul.f32 %v121, %v276
  %v642 = vmul.f32 %v123, %v276
  %645 = vrot.lane.b32.xlu0 %v641, 112
  %v646 = vpop.permute.xlu0 %645
  %647 = vrot.lane.b32.xlu0 %v642, 112
  %v648 = vpop.permute.xlu0 %647
  %v651 = vsel %vm448, %v285, 0.0
  %652 = vadd.xlane.f32.xlu0 %v651
  %v653 = vpop.xlane.xlu0 %652
  %v654 = vsel %vm130, %v646, 0.0
  %655 = vadd.xlane.f32.xlu0 %v654
  %v656 = vpop.xlane.xlu0 %655
  %v657 = vsel %vm455, %v648, 0.0
  %658 = vadd.xlane.f32.xlu0 %v657
  %v659 = vpop.xlane.xlu0 %658
  %660 = vrot.lane.b32.xlu0 %v463, 112
  %v661 = vpop.permute.xlu0 %660
  %662 = vrot.lane.b32.xlu0 %v465, 112
  %v663 = vpop.permute.xlu0 %662
  %v664 = vsel %vm130, %v661, 0
  %v666 = vsel %vm130, %v663, 0
  %668 = vmatpush.xpose.msra.mxu0 0.0
  %669 = vmatpush.xpose.msra.mxu0 0.0
  %670 = vmatpush.xpose.msra.mxu0 0.0
  %671 = vmatpush.xpose.msra.mxu0 0.0
  %672 = vmatpush.xpose.msra.mxu0 0.0
  %673 = vmatpush.xpose.msra.mxu0 0.0
  %674 = vmatpush.xpose.msra.mxu0 0.0
  %675 = vmatpush.xpose.msra.mxu0 0.0
  %676 = vmatpush.xpose.msra.mxu0 0.0
  %677 = vmatpush.xpose.msra.mxu0 0.0
  %678 = vmatpush.xpose.msra.mxu0 0.0
  %679 = vmatpush.xpose.msra.mxu0 0.0
  %680 = vmatpush.xpose.msra.mxu0 0.0
  %681 = vmatpush.xpose.msra.mxu0 0.0
  %682 = vmatpush.xpose.msra.mxu0 %v666
  %683 = vmatpush.xpose.msra.mxu0 %v664
  %684 = vmatmul.f32.gmra.mxu0 %v299
  %v685 = vpop.f32.mrf.mxu0
  %v686 = vadd.f32 0.0, %v685
  %687 = vdwg.mxu0
  %v688 = vperm.slane %v686, 0
  %v689 = vadd.f32 %v653, %v688
  %v690 = vadd.f32 %v656, %v688
  %v691 = vadd.f32 %v659, %v688
  %vm692 = vcmp.gt.f32.partialorder %v689, 0.0
  %vm693 = vcmp.gt.f32.partialorder %v690, 0.0
  %vm694 = vcmp.gt.f32.partialorder %v691, 0.0
  %v695 = vmul.f32 %v689, 0.2
  %v696 = vmul.f32 %v690, 0.2
  %v697 = vmul.f32 %v691, 0.2
  %v698 = vsel %vm692, %v689, %v695
  %v699 = vsel %vm693, %v690, %v696
  %v700 = vsel %vm694, %v691, %v697
  %v701 = vadd.f32 %v698, %v505
  %v702 = vadd.f32 %v699, %v507
  %v703 = vadd.f32 %v700, %v506
  %v704 = vsel %vm514, %v701, -inf
  %705 = vmax.xlane.f32.xlu0 %v704
  %v706 = vpop.xlane.xlu0 %705
  %v707 = vsel %vm178, %v702, -inf
  %708 = vmax.xlane.f32.xlu0 %v707
  %v709 = vpop.xlane.xlu0 %708
  %v710 = vsel %vm521, %v703, -inf
  %711 = vmax.xlane.f32.xlu0 %v710
  %v712 = vpop.xlane.xlu0 %711
  %v713 = vsub.f32 %v701, %v706
  %v714 = vsub.f32 %v702, %v709
  %v715 = vsub.f32 %v703, %v712
  %v716 = vmul.f32 %v713, 1.442695
  %v717 = vpow.pop %v716
  %v718 = vmul.f32 %v714, 1.442695
  %v719 = vpow.pop %v718
  %v720 = vmul.f32 %v715, 1.442695
  %v721 = vpow.pop %v720
  %v722 = vsel %vm514, %v717, 0.0
  %723 = vadd.xlane.f32.xlu0 %v722
  %v724 = vpop.xlane.xlu0 %723
  %v725 = vsel %vm178, %v719, 0.0
  %726 = vadd.xlane.f32.xlu0 %v725
  %v727 = vpop.xlane.xlu0 %726
  %v728 = vsel %vm521, %v721, 0.0
  %729 = vadd.xlane.f32.xlu0 %v728
  %v730 = vpop.xlane.xlu0 %729
  %v731 = vrcp.pop %v724
  %v732 = vmul.f32 %v724, %v731
  %v733 = vsub.f32 1.0, %v732
  %v734 = vmul.f32 %v731, %v733
  %v735 = vadd.f32 %v731, %v734
  %vm736 = vweird.f32 %v724
  %vm737 = vweird.f32 %v731
  %vm738 = vmor %vm736, %vm737
  %v739 = vsel %vm738, %v731, %v735
  %v740 = vand.u32 2147483647, %v724
  %vm741 = vcmp.eq.f32.partialorder %v740, 8.507059e+37
  %v742 = vand.u32 %v724, 2147483648
  %v743 = vor.u32 1.1754944e-38, %v742
  %v744 = vsel %vm741, %v743, %v739
  %v745 = vmul.f32 %v717, %v744
  %v746 = vrcp.pop %v727
  %v747 = vmul.f32 %v727, %v746
  %v748 = vsub.f32 1.0, %v747
  %v749 = vmul.f32 %v746, %v748
  %v750 = vadd.f32 %v746, %v749
  %vm751 = vweird.f32 %v727
  %vm752 = vweird.f32 %v746
  %vm753 = vmor %vm751, %vm752
  %v754 = vsel %vm753, %v746, %v750
  %v755 = vand.u32 2147483647, %v727
  %vm756 = vcmp.eq.f32.partialorder %v755, 8.507059e+37
  %v757 = vand.u32 %v727, 2147483648
  %v758 = vor.u32 1.1754944e-38, %v757
  %v759 = vsel %vm756, %v758, %v754
  %v760 = vmul.f32 %v719, %v759
  %v761 = vrcp.pop %v730
  %v762 = vmul.f32 %v730, %v761
  %v763 = vsub.f32 1.0, %v762
  %v764 = vmul.f32 %v761, %v763
  %v765 = vadd.f32 %v761, %v764
  %vm766 = vweird.f32 %v730
  %vm767 = vweird.f32 %v761
  %vm768 = vmor %vm766, %vm767
  %v769 = vsel %vm768, %v761, %v765
  %v770 = vand.u32 2147483647, %v730
  %vm771 = vcmp.eq.f32.partialorder %v770, 8.507059e+37
  %v772 = vand.u32 %v730, 2147483648
  %v773 = vor.u32 1.1754944e-38, %v772
  %v774 = vsel %vm771, %v773, %v769
  %v775 = vmul.f32 %v721, %v774
  %v779 = vrot.slane %v745, 7
  %v780 = vrot.slane %v760, 7
  %v781 = vsel %vm88, %v779, %v780
  %v782 = vrot.slane %v775, 7
  %v783 = vsel %vm88, %v780, %v782
  %v785 = vsel %vm178, %v781, 0
  %v787 = vsel %vm178, %v783, 0
  %v789 = vsel %vm86, %v663, 0
  %791 = vmatpush.msra.mxu0 0.0
  %792 = vmatpush.msra.mxu0 0.0
  %793 = vmatpush.msra.mxu0 0.0
  %794 = vmatpush.msra.mxu0 0.0
  %795 = vmatpush.msra.mxu0 0.0
  %796 = vmatpush.msra.mxu0 0.0
  %797 = vmatpush.msra.mxu0 0.0
  %798 = vmatpush.msra.mxu0 0.0
  %799 = vmatpush.msra.mxu0 0.0
  %800 = vmatpush.msra.mxu0 0.0
  %801 = vmatpush.msra.mxu0 0.0
  %802 = vmatpush.msra.mxu0 0.0
  %803 = vmatpush.msra.mxu0 0.0
  %804 = vmatpush.msra.mxu0 0.0
  %805 = vmatpush.msra.mxu0 %v789
  %806 = vmatpush.msra.mxu0 %v661
  %807 = vmatmul.f32.gmra.mxu0 %v785
  %v808 = vpop.f32.mrf.mxu0
  %v809 = vadd.f32 0.0, %v808
  %810 = vmatmul.f32.gmra.mxu0 %v787
  %v811 = vpop.f32.mrf.mxu0
  %v812 = vadd.f32 0.0, %v811
  %813 = vdwg.mxu0
  %vm814 = vcmp.gt.f32.partialorder %v809, 0.0
  %vm815 = vcmp.gt.f32.partialorder %v812, 0.0
  %v816 = vmin.f32 %v809, 0.0
  %v817 = vmin.f32 %v812, 0.0
  %v818 = vmul.f32 %v816, 1.442695
  %v819 = vpow.pop %v818
  %v820 = vmul.f32 %v817, 1.442695
  %v821 = vpow.pop %v820
  %v822 = vsub.f32 %v819, 1.0
  %v823 = vsub.f32 %v821, 1.0
  %v824 = vsel %vm814, %v809, %v822
  %v825 = vsel %vm815, %v812, %v823
  %v826 = vadd.f32 %v638, %v745
  %v827 = vadd.f32 %v639, %v760
  %v828 = vadd.f32 %v640, %v775
  %831 = vrot.lane.b32.xlu0 %v824, 16
  %v832 = vpop.permute.xlu0 %831
  %833 = vrot.lane.b32.xlu0 %v825, 16
  %v834 = vpop.permute.xlu0 %833
  %v837 = vsel %vm130, %v636, %v832
  %v838 = vsel %vm130, %v637, %v834
  %v839 = vmul.f32 %v826, 0.5
  %v840 = vmul.f32 %v827, 0.5
  %v841 = vmul.f32 %v828, 0.5
  %v842 = vsel %vm178, %v839, 0.0
  %v843 = vsel %vm178, %v840, 0.0
  %v844 = vsel %vm178, %v841, 0.0
  %s845 = scalar_lea.vmem %s16, 16
  %846 = vst [vmem:[%s845 - $0x7] sm:$0x80] %v842
  %847 = vst [vmem:[%s845 + $0x1] sm:$0xff] %v843
  %848 = vst [vmem:[%s845 + $0x9] sm:$0x3f] %v844
  %v851 = vrot.slane %v837, 1
  %v852 = vrot.slane %v838, 1
  %v853 = vsel %vm86, %v851, %v852
  %v857 = vsel %vm86, %v439, %v851
  %v858 = vld [vmem:[%s6] sm:$0xff]
  %v859 = vld [vmem:[%s6 + $0x8] sm:$0xff]
  %v860 = vld [vmem:[%s6 + $0x10] sm:$0xff]
  %v861 = vld [vmem:[%s6 + $0x18] sm:$0xff]
  %v862 = vpack.c.bf16 %v857, %v438
  %v863 = vpack.c.bf16 %v852, %v853
  %v864 = vpack.c.bf16 %v859, %v858
  %v865 = vpack.c.bf16 %v861, %v860
  %v867 = vsel %vm99, %v862, 0
  %v870 = vsel %vm99, %v863, 0
  %872 = vmatpush.bf16.msra.mxu0 0
  %873 = vmatpush.bf16.msra.mxu0 0
  %874 = vmatpush.bf16.msra.mxu0 0
  %875 = vmatpush.bf16.msra.mxu0 0
  %876 = vmatpush.bf16.msra.mxu0 0
  %877 = vmatpush.bf16.msra.mxu0 0
  %878 = vmatpush.bf16.msra.mxu0 %v865
  %879 = vmatpush.bf16.msra.mxu0 %v864
  %880 = vmatmul.bf16.gmra.mxu0 %v867
  %v881 = vpop.f32.mrf.mxu0
  %v882 = vadd.f32 0.0, %v881
  %v883 = vpop.f32.mrf.mxu0
  %v884 = vadd.f32 0.0, %v883
  %885 = vmatmul.bf16.gmra.mxu0 %v870
  %v886 = vpop.f32.mrf.mxu0
  %v887 = vadd.f32 0.0, %v886
  %v888 = vpop.f32.mrf.mxu0
  %v889 = vadd.f32 0.0, %v888
  %890 = vdwg.mxu0
  %v891 = vld [vmem:[%s7] sm:$0x1]
  %v892 = vld [vmem:[%s8] sm:$0x1]
  %v894 = vperm.slane %v891, 0
  %v896 = vmul.f32 %v882, %v894
  %v897 = vmul.f32 %v884, %v894
  %v898 = vsel %vm99, %v896, 0.0
  %899 = vadd.xlane.f32.xlu0 %v898
  %v900 = vpop.xlane.xlu0 %899
  %vm901 = vcmask 260096
  %v902 = vsel %vm901, %v897, 0.0
  %903 = vadd.xlane.f32.xlu0 %v902
  %v904 = vpop.xlane.xlu0 %903
  %v906 = vsel %vm99, %v892, 0
  %v909 = vsel %vm99, %v882, 0
  %v912 = vsel %vm99, %v884, 0
  %914 = vmatpush.xpose.msra.mxu0 0.0
  %915 = vmatpush.xpose.msra.mxu0 0.0
  %916 = vmatpush.xpose.msra.mxu0 0.0
  %917 = vmatpush.xpose.msra.mxu0 0.0
  %918 = vmatpush.xpose.msra.mxu0 0.0
  %919 = vmatpush.xpose.msra.mxu0 0.0
  %920 = vmatpush.xpose.msra.mxu0 0.0
  %921 = vmatpush.xpose.msra.mxu0 0.0
  %922 = vmatpush.xpose.msra.mxu0 0.0
  %923 = vmatpush.xpose.msra.mxu0 0.0
  %924 = vmatpush.xpose.msra.mxu0 0.0
  %925 = vmatpush.xpose.msra.mxu0 0.0
  %926 = vmatpush.xpose.msra.mxu0 0.0
  %927 = vmatpush.xpose.msra.mxu0 0.0
  %928 = vmatpush.xpose.msra.mxu0 %v912
  %929 = vmatpush.xpose.msra.mxu0 %v909
  %930 = vmatmul.f32.gmra.mxu0 %v906
  %v931 = vpop.f32.mrf.mxu0
  %v932 = vadd.f32 0.0, %v931
  %933 = vdwg.mxu0
  %v934 = vperm.slane %v932, 0
  %v935 = vadd.f32 %v900, %v934
  %v936 = vadd.f32 %v904, %v934
  %vm937 = vcmp.gt.f32.partialorder %v935, 0.0
  %vm938 = vcmp.gt.f32.partialorder %v936, 0.0
  %v939 = vmul.f32 %v935, 0.2
  %v940 = vmul.f32 %v936, 0.2
  %v941 = vsel %vm937, %v935, %v939
  %v942 = vsel %vm938, %v936, %v940
  %v943 = vadd.f32 %v941, %v53
  %v944 = vadd.f32 %v942, %v54
  %v945 = vsel %vm178, %v943, -inf
  %946 = vmax.xlane.f32.xlu0 %v945
  %v947 = vpop.xlane.xlu0 %946
  %v948 = vsel %vm182, %v944, -inf
  %949 = vmax.xlane.f32.xlu0 %v948
  %v950 = vpop.xlane.xlu0 %949
  %v951 = vsub.f32 %v943, %v947
  %v952 = vsub.f32 %v944, %v950
  %v953 = vmul.f32 %v951, 1.442695
  %v954 = vpow.pop %v953
  %v955 = vmul.f32 %v952, 1.442695
  %v956 = vpow.pop %v955
  %v957 = vsel %vm178, %v954, 0.0
  %958 = vadd.xlane.f32.xlu0 %v957
  %v959 = vpop.xlane.xlu0 %958
  %v960 = vsel %vm182, %v956, 0.0
  %961 = vadd.xlane.f32.xlu0 %v960
  %v962 = vpop.xlane.xlu0 %961
  %v963 = vrcp.pop %v959
  %v964 = vmul.f32 %v959, %v963
  %v965 = vsub.f32 1.0, %v964
  %v966 = vmul.f32 %v963, %v965
  %v967 = vadd.f32 %v963, %v966
  %vm968 = vweird.f32 %v959
  %vm969 = vweird.f32 %v963
  %vm970 = vmor %vm968, %vm969
  %v971 = vsel %vm970, %v963, %v967
  %v972 = vand.u32 2147483647, %v959
  %vm973 = vcmp.eq.f32.partialorder %v972, 8.507059e+37
  %v974 = vand.u32 %v959, 2147483648
  %v975 = vor.u32 1.1754944e-38, %v974
  %v976 = vsel %vm973, %v975, %v971
  %v977 = vmul.f32 %v954, %v976
  %v978 = vrcp.pop %v962
  %v979 = vmul.f32 %v962, %v978
  %v980 = vsub.f32 1.0, %v979
  %v981 = vmul.f32 %v978, %v980
  %v982 = vadd.f32 %v978, %v981
  %vm983 = vweird.f32 %v962
  %vm984 = vweird.f32 %v978
  %vm985 = vmor %vm983, %vm984
  %v986 = vsel %vm985, %v978, %v982
  %v987 = vand.u32 2147483647, %v962
  %vm988 = vcmp.eq.f32.partialorder %v987, 8.507059e+37
  %v989 = vand.u32 %v962, 2147483648
  %v990 = vor.u32 1.1754944e-38, %v989
  %v991 = vsel %vm988, %v990, %v986
  %v992 = vmul.f32 %v956, %v991
  %v994 = vsel %vm178, %v977, 0
  %v997 = vsel %vm178, %v992, 0
  %v999 = vsel %vm86, %v884, 0
  %1001 = vmatpush.msra.mxu0 0.0
  %1002 = vmatpush.msra.mxu0 0.0
  %1003 = vmatpush.msra.mxu0 0.0
  %1004 = vmatpush.msra.mxu0 0.0
  %1005 = vmatpush.msra.mxu0 0.0
  %1006 = vmatpush.msra.mxu0 0.0
  %1007 = vmatpush.msra.mxu0 0.0
  %1008 = vmatpush.msra.mxu0 0.0
  %1009 = vmatpush.msra.mxu0 0.0
  %1010 = vmatpush.msra.mxu0 0.0
  %1011 = vmatpush.msra.mxu0 0.0
  %1012 = vmatpush.msra.mxu0 0.0
  %1013 = vmatpush.msra.mxu0 0.0
  %1014 = vmatpush.msra.mxu0 0.0
  %1015 = vmatpush.msra.mxu0 %v999
  %1016 = vmatpush.msra.mxu0 %v882
  %1017 = vmatmul.f32.gmra.mxu0 %v994
  %v1018 = vpop.f32.mrf.mxu0
  %v1019 = vadd.f32 0.0, %v1018
  %1020 = vmatmul.f32.gmra.mxu0 %v997
  %v1021 = vpop.f32.mrf.mxu0
  %1022 = vdwg.mxu0
  %vm1023 = vcmp.gt.f32.partialorder %v1019, 0.0
  %v1024 = vmin.f32 %v1019, 0.0
  %v1025 = vmul.f32 %v1024, 1.442695
  %v1026 = vpow.pop %v1025
  %v1027 = vsub.f32 %v1026, 1.0
  %v1028 = vsel %vm1023, %v1019, %v1027
  %v1029 = vld [vmem:[%s9] sm:$0xff]
  %v1030 = vld [vmem:[%s9 + $0x8] sm:$0xff]
  %v1031 = vld [vmem:[%s9 + $0x10] sm:$0xff]
  %v1032 = vld [vmem:[%s9 + $0x18] sm:$0xff]
  %v1033 = vld [vmem:[%s10] sm:$0x1]
  %v1035 = vsel %vm99, %v1028, 0
  %1037 = vmatpush.msra.mxu0 0.0
  %1038 = vmatpush.msra.mxu0 0.0
  %1039 = vmatpush.msra.mxu0 0.0
  %1040 = vmatpush.msra.mxu0 0.0
  %1041 = vmatpush.msra.mxu0 0.0
  %1042 = vmatpush.msra.mxu0 0.0
  %1043 = vmatpush.msra.mxu0 0.0
  %1044 = vmatpush.msra.mxu0 0.0
  %1045 = vmatpush.msra.mxu0 0.0
  %1046 = vmatpush.msra.mxu0 0.0
  %1047 = vmatpush.msra.mxu0 0.0
  %1048 = vmatpush.msra.mxu0 0.0
  %1049 = vmatpush.msra.mxu0 %v1032
  %1050 = vmatpush.msra.mxu0 %v1031
  %1051 = vmatpush.msra.mxu0 %v1030
  %1052 = vmatpush.msra.mxu0 %v1029
  %1053 = vmatmul.f32.gmra.mxu0 %v1035
  %v1054 = vpop.f32.mrf.mxu0
  %v1055 = vadd.f32 %v1033, %v1054
  %1056 = vdwg.mxu0
  %v1057 = vmax.f32 %v1055, 0.0
  %v1058 = vld [vmem:[%s11] sm:$0xff]
  %v1059 = vld [vmem:[%s11 + $0x8] sm:$0xff]
  %v1060 = vld [vmem:[%s11 + $0x10] sm:$0xff]
  %v1061 = vld [vmem:[%s11 + $0x18] sm:$0xff]
  %v1062 = vld [vmem:[%s11 + $0x20] sm:$0xff]
  %v1063 = vld [vmem:[%s11 + $0x28] sm:$0xff]
  %v1064 = vld [vmem:[%s11 + $0x30] sm:$0xff]
  %v1065 = vld [vmem:[%s11 + $0x38] sm:$0xff]
  %v1066 = vld [vmem:[%s12] sm:$0x1]
  %vm1067 = vcmask 523264
  %v1069 = vsel %vm1067, %v1057, 0
  %1071 = vmatpush.msra.mxu0 0.0
  %1072 = vmatpush.msra.mxu0 0.0
  %1073 = vmatpush.msra.mxu0 0.0
  %1074 = vmatpush.msra.mxu0 0.0
  %1075 = vmatpush.msra.mxu0 0.0
  %1076 = vmatpush.msra.mxu0 0.0
  %1077 = vmatpush.msra.mxu0 0.0
  %1078 = vmatpush.msra.mxu0 0.0
  %1079 = vmatpush.msra.mxu0 %v1065
  %1080 = vmatpush.msra.mxu0 %v1064
  %1081 = vmatpush.msra.mxu0 %v1063
  %1082 = vmatpush.msra.mxu0 %v1062
  %1083 = vmatpush.msra.mxu0 %v1061
  %1084 = vmatpush.msra.mxu0 %v1060
  %1085 = vmatpush.msra.mxu0 %v1059
  %1086 = vmatpush.msra.mxu0 %v1058
  %1087 = vmatmul.f32.gmra.mxu0 %v1069
  %v1088 = vpop.f32.mrf.mxu0
  %v1089 = vadd.f32 %v1066, %v1088
  %1090 = vdwg.mxu0
  %vm1091 = vcmask 257024
  %v1092 = vsel %vm1091, %v55, 0.0
  %v1093 = vrot.slane %v1092, 4
  %v1094 = vadd.f32 %v1092, %v1093
  %v1095 = vrot.slane %v1094, 2
  %v1096 = vadd.f32 %v1094, %v1095
  %v1097 = vrot.slane %v1096, 1
  %v1098 = vadd.f32 %v1096, %v1097
  %v1099 = vrcp.pop 4.0
  %v1100 = vmul.f32 4.0, %v1099
  %v1101 = vsub.f32 1.0, %v1100
  %v1102 = vmul.f32 %v1099, %v1101
  %v1103 = vadd.f32 %v1099, %v1102
  %vm1104 = vweird.f32 %v1099
  %v1105 = vsel %vm1104, %v1099, %v1103
  %v1106 = vmul.f32 %v1098, %v1105
  %v1107 = vld [vmem:[%s13] sm:$0xff]
  %v1108 = vld [vmem:[%s13 + $0x8] sm:$0xff]
  %v1109 = vld [vmem:[%s13 + $0x10] sm:$0xff]
  %v1110 = vld [vmem:[%s13 + $0x18] sm:$0xff]
  %v1111 = vld [vmem:[%s14] sm:$0x1]
  %v1113 = vsel %vm99, %v1106, 0
  %1115 = vmatpush.msra.mxu0 0.0
  %1116 = vmatpush.msra.mxu0 0.0
  %1117 = vmatpush.msra.mxu0 0.0
  %1118 = vmatpush.msra.mxu0 0.0
  %1119 = vmatpush.msra.mxu0 0.0
  %1120 = vmatpush.msra.mxu0 0.0
  %1121 = vmatpush.msra.mxu0 0.0
  %1122 = vmatpush.msra.mxu0 0.0
  %1123 = vmatpush.msra.mxu0 0.0
  %1124 = vmatpush.msra.mxu0 0.0
  %1125 = vmatpush.msra.mxu0 0.0
  %1126 = vmatpush.msra.mxu0 0.0
  %1127 = vmatpush.msra.mxu0 %v1110
  %1128 = vmatpush.msra.mxu0 %v1109
  %1129 = vmatpush.msra.mxu0 %v1108
  %1130 = vmatpush.msra.mxu0 %v1107
  %1131 = vmatmul.f32.gmra.mxu0 %v1113
  %v1132 = vpop.f32.mrf.mxu0
  %v1133 = vadd.f32 %v1111, %v1132
  %1134 = vdwg.mxu0
  %1135 = vrot.lane.b32.xlu0 %v1057, 32
  %v1136 = vpop.permute.xlu0 %1135
  %1139 = vrot.lane.b32.xlu0 %v1089, 96
  %v1140 = vpop.permute.xlu0 %1139
  %1143 = vrot.lane.b32.xlu0 %v1133, 98
  %v1144 = vpop.permute.xlu0 %1143
  %v1146 = vsel %vm99, %v1106, %v1136
  %vm1147 = vcmask 785408
  %v1148 = vsel %vm1147, %v1146, %v1140
  %vm1149 = vcmask 801792
  %v1150 = vsel %vm1149, %v1148, %v1144
  %vm1151 = vcmask 818176
  %v1152 = vsel %vm1151, %v1150, 0.0
  %v1153 = vmul.f32 %v887, %v894
  %v1154 = vmul.f32 %v889, %v894
  %vm1155 = vcmask 261127
  %v1156 = vsel %vm1155, %v897, 0.0
  %1157 = vadd.xlane.f32.xlu0 %v1156
  %v1158 = vpop.xlane.xlu0 %1157
  %v1159 = vsel %vm99, %v1153, 0.0
  %1160 = vadd.xlane.f32.xlu0 %v1159
  %v1161 = vpop.xlane.xlu0 %1160
  %vm1162 = vcmask 259072
  %v1163 = vsel %vm1162, %v1154, 0.0
  %1164 = vadd.xlane.f32.xlu0 %v1163
  %v1165 = vpop.xlane.xlu0 %1164
  %v1168 = vrot.slane %v884, 7
  %v1169 = vrot.slane %v887, 7
  %v1170 = vsel %vm88, %v1168, %v1169
  %v1171 = vrot.slane %v889, 7
  %v1172 = vsel %vm88, %v1169, %v1171
  %v1173 = vsel %vm99, %v1170, 0
  %v1175 = vsel %vm99, %v1172, 0
  %1177 = vmatpush.xpose.msra.mxu0 0.0
  %1178 = vmatpush.xpose.msra.mxu0 0.0
  %1179 = vmatpush.xpose.msra.mxu0 0.0
  %1180 = vmatpush.xpose.msra.mxu0 0.0
  %1181 = vmatpush.xpose.msra.mxu0 0.0
  %1182 = vmatpush.xpose.msra.mxu0 0.0
  %1183 = vmatpush.xpose.msra.mxu0 0.0
  %1184 = vmatpush.xpose.msra.mxu0 0.0
  %1185 = vmatpush.xpose.msra.mxu0 0.0
  %1186 = vmatpush.xpose.msra.mxu0 0.0
  %1187 = vmatpush.xpose.msra.mxu0 0.0
  %1188 = vmatpush.xpose.msra.mxu0 0.0
  %1189 = vmatpush.xpose.msra.mxu0 0.0
  %1190 = vmatpush.xpose.msra.mxu0 0.0
  %1191 = vmatpush.xpose.msra.mxu0 %v1175
  %1192 = vmatpush.xpose.msra.mxu0 %v1173
  %1193 = vmatmul.f32.gmra.mxu0 %v906
  %v1194 = vpop.f32.mrf.mxu0
  %v1195 = vadd.f32 0.0, %v1194
  %1196 = vdwg.mxu0
  %v1197 = vperm.slane %v1195, 0
  %v1198 = vadd.f32 %v1158, %v1197
  %v1199 = vadd.f32 %v1161, %v1197
  %v1200 = vadd.f32 %v1165, %v1197
  %vm1201 = vcmp.gt.f32.partialorder %v1198, 0.0
  %vm1202 = vcmp.gt.f32.partialorder %v1199, 0.0
  %vm1203 = vcmp.gt.f32.partialorder %v1200, 0.0
  %v1204 = vmul.f32 %v1198, 0.2
  %v1205 = vmul.f32 %v1199, 0.2
  %v1206 = vmul.f32 %v1200, 0.2
  %v1207 = vsel %vm1201, %v1198, %v1204
  %v1208 = vsel %vm1202, %v1199, %v1205
  %v1209 = vsel %vm1203, %v1200, %v1206
  %v1210 = vadd.f32 %v1207, %v505
  %v1211 = vadd.f32 %v1208, %v507
  %v1212 = vadd.f32 %v1209, %v506
  %v1213 = vsel %vm514, %v1210, -inf
  %1214 = vmax.xlane.f32.xlu0 %v1213
  %v1215 = vpop.xlane.xlu0 %1214
  %v1216 = vsel %vm178, %v1211, -inf
  %1217 = vmax.xlane.f32.xlu0 %v1216
  %v1218 = vpop.xlane.xlu0 %1217
  %v1219 = vsel %vm521, %v1212, -inf
  %1220 = vmax.xlane.f32.xlu0 %v1219
  %v1221 = vpop.xlane.xlu0 %1220
  %v1222 = vsub.f32 %v1210, %v1215
  %v1223 = vsub.f32 %v1211, %v1218
  %v1224 = vsub.f32 %v1212, %v1221
  %v1225 = vmul.f32 %v1222, 1.442695
  %v1226 = vpow.pop %v1225
  %v1227 = vmul.f32 %v1223, 1.442695
  %v1228 = vpow.pop %v1227
  %v1229 = vmul.f32 %v1224, 1.442695
  %v1230 = vpow.pop %v1229
  %v1231 = vsel %vm514, %v1226, 0.0
  %1232 = vadd.xlane.f32.xlu0 %v1231
  %v1233 = vpop.xlane.xlu0 %1232
  %v1234 = vsel %vm178, %v1228, 0.0
  %1235 = vadd.xlane.f32.xlu0 %v1234
  %v1236 = vpop.xlane.xlu0 %1235
  %v1237 = vsel %vm521, %v1230, 0.0
  %1238 = vadd.xlane.f32.xlu0 %v1237
  %v1239 = vpop.xlane.xlu0 %1238
  %v1240 = vrcp.pop %v1233
  %v1241 = vmul.f32 %v1233, %v1240
  %v1242 = vsub.f32 1.0, %v1241
  %v1243 = vmul.f32 %v1240, %v1242
  %v1244 = vadd.f32 %v1240, %v1243
  %vm1245 = vweird.f32 %v1233
  %vm1246 = vweird.f32 %v1240
  %vm1247 = vmor %vm1245, %vm1246
  %v1248 = vsel %vm1247, %v1240, %v1244
  %v1249 = vand.u32 2147483647, %v1233
  %vm1250 = vcmp.eq.f32.partialorder %v1249, 8.507059e+37
  %v1251 = vand.u32 %v1233, 2147483648
  %v1252 = vor.u32 1.1754944e-38, %v1251
  %v1253 = vsel %vm1250, %v1252, %v1248
  %v1254 = vmul.f32 %v1226, %v1253
  %v1255 = vrcp.pop %v1236
  %v1256 = vmul.f32 %v1236, %v1255
  %v1257 = vsub.f32 1.0, %v1256
  %v1258 = vmul.f32 %v1255, %v1257
  %v1259 = vadd.f32 %v1255, %v1258
  %vm1260 = vweird.f32 %v1236
  %vm1261 = vweird.f32 %v1255
  %vm1262 = vmor %vm1260, %vm1261
  %v1263 = vsel %vm1262, %v1255, %v1259
  %v1264 = vand.u32 2147483647, %v1236
  %vm1265 = vcmp.eq.f32.partialorder %v1264, 8.507059e+37
  %v1266 = vand.u32 %v1236, 2147483648
  %v1267 = vor.u32 1.1754944e-38, %v1266
  %v1268 = vsel %vm1265, %v1267, %v1263
  %v1269 = vmul.f32 %v1228, %v1268
  %v1270 = vrcp.pop %v1239
  %v1271 = vmul.f32 %v1239, %v1270
  %v1272 = vsub.f32 1.0, %v1271
  %v1273 = vmul.f32 %v1270, %v1272
  %v1274 = vadd.f32 %v1270, %v1273
  %vm1275 = vweird.f32 %v1239
  %vm1276 = vweird.f32 %v1270
  %vm1277 = vmor %vm1275, %vm1276
  %v1278 = vsel %vm1277, %v1270, %v1274
  %v1279 = vand.u32 2147483647, %v1239
  %vm1280 = vcmp.eq.f32.partialorder %v1279, 8.507059e+37
  %v1281 = vand.u32 %v1239, 2147483648
  %v1282 = vor.u32 1.1754944e-38, %v1281
  %v1283 = vsel %vm1280, %v1282, %v1278
  %v1284 = vmul.f32 %v1230, %v1283
  %v1288 = vrot.slane %v1254, 7
  %v1289 = vrot.slane %v1269, 7
  %v1290 = vsel %vm88, %v1288, %v1289
  %v1291 = vrot.slane %v1284, 7
  %v1292 = vsel %vm88, %v1289, %v1291
  %v1294 = vsel %vm178, %v1290, 0
  %v1296 = vsel %vm178, %v1292, 0
  %v1298 = vsel %vm86, %v1172, 0
  %1300 = vmatpush.msra.mxu0 0.0
  %1301 = vmatpush.msra.mxu0 0.0
  %1302 = vmatpush.msra.mxu0 0.0
  %1303 = vmatpush.msra.mxu0 0.0
  %1304 = vmatpush.msra.mxu0 0.0
  %1305 = vmatpush.msra.mxu0 0.0
  %1306 = vmatpush.msra.mxu0 0.0
  %1307 = vmatpush.msra.mxu0 0.0
  %1308 = vmatpush.msra.mxu0 0.0
  %1309 = vmatpush.msra.mxu0 0.0
  %1310 = vmatpush.msra.mxu0 0.0
  %1311 = vmatpush.msra.mxu0 0.0
  %1312 = vmatpush.msra.mxu0 0.0
  %1313 = vmatpush.msra.mxu0 0.0
  %1314 = vmatpush.msra.mxu0 %v1298
  %1315 = vmatpush.msra.mxu0 %v1170
  %1316 = vmatmul.f32.gmra.mxu0 %v1294
  %v1317 = vpop.f32.mrf.mxu0
  %v1318 = vadd.f32 0.0, %v1317
  %1319 = vmatmul.f32.gmra.mxu0 %v1296
  %v1320 = vpop.f32.mrf.mxu0
  %1321 = vdwg.mxu0
  %vm1322 = vcmp.gt.f32.partialorder %v1318, 0.0
  %v1323 = vmin.f32 %v1318, 0.0
  %v1324 = vmul.f32 %v1323, 1.442695
  %v1325 = vpow.pop %v1324
  %v1326 = vsub.f32 %v1325, 1.0
  %v1327 = vsel %vm1322, %v1318, %v1326
  %v1329 = vsel %vm99, %v1327, 0
  %1331 = vmatpush.msra.mxu0 0.0
  %1332 = vmatpush.msra.mxu0 0.0
  %1333 = vmatpush.msra.mxu0 0.0
  %1334 = vmatpush.msra.mxu0 0.0
  %1335 = vmatpush.msra.mxu0 0.0
  %1336 = vmatpush.msra.mxu0 0.0
  %1337 = vmatpush.msra.mxu0 0.0
  %1338 = vmatpush.msra.mxu0 0.0
  %1339 = vmatpush.msra.mxu0 0.0
  %1340 = vmatpush.msra.mxu0 0.0
  %1341 = vmatpush.msra.mxu0 0.0
  %1342 = vmatpush.msra.mxu0 0.0
  %1343 = vmatpush.msra.mxu0 %v1032
  %1344 = vmatpush.msra.mxu0 %v1031
  %1345 = vmatpush.msra.mxu0 %v1030
  %1346 = vmatpush.msra.mxu0 %v1029
  %1347 = vmatmul.f32.gmra.mxu0 %v1329
  %v1348 = vpop.f32.mrf.mxu0
  %v1349 = vadd.f32 %v1033, %v1348
  %1350 = vdwg.mxu0
  %v1351 = vmax.f32 %v1349, 0.0
  %v1353 = vsel %vm1067, %v1351, 0
  %1355 = vmatpush.msra.mxu0 0.0
  %1356 = vmatpush.msra.mxu0 0.0
  %1357 = vmatpush.msra.mxu0 0.0
  %1358 = vmatpush.msra.mxu0 0.0
  %1359 = vmatpush.msra.mxu0 0.0
  %1360 = vmatpush.msra.mxu0 0.0
  %1361 = vmatpush.msra.mxu0 0.0
  %1362 = vmatpush.msra.mxu0 0.0
  %1363 = vmatpush.msra.mxu0 %v1065
  %1364 = vmatpush.msra.mxu0 %v1064
  %1365 = vmatpush.msra.mxu0 %v1063
  %1366 = vmatpush.msra.mxu0 %v1062
  %1367 = vmatpush.msra.mxu0 %v1061
  %1368 = vmatpush.msra.mxu0 %v1060
  %1369 = vmatpush.msra.mxu0 %v1059
  %1370 = vmatpush.msra.mxu0 %v1058
  %1371 = vmatmul.f32.gmra.mxu0 %v1353
  %v1372 = vpop.f32.mrf.mxu0
  %v1373 = vadd.f32 %v1066, %v1372
  %1374 = vdwg.mxu0
  %v1375 = vsel %vm1091, %v56, 0.0
  %v1376 = vrot.slane %v1375, 4
  %v1377 = vadd.f32 %v1375, %v1376
  %v1378 = vrot.slane %v1377, 2
  %v1379 = vadd.f32 %v1377, %v1378
  %v1380 = vrot.slane %v1379, 1
  %v1381 = vadd.f32 %v1379, %v1380
  %v1382 = vmul.f32 %v1381, %v1105
  %v1384 = vsel %vm99, %v1382, 0
  %1386 = vmatpush.msra.mxu0 0.0
  %1387 = vmatpush.msra.mxu0 0.0
  %1388 = vmatpush.msra.mxu0 0.0
  %1389 = vmatpush.msra.mxu0 0.0
  %1390 = vmatpush.msra.mxu0 0.0
  %1391 = vmatpush.msra.mxu0 0.0
  %1392 = vmatpush.msra.mxu0 0.0
  %1393 = vmatpush.msra.mxu0 0.0
  %1394 = vmatpush.msra.mxu0 0.0
  %1395 = vmatpush.msra.mxu0 0.0
  %1396 = vmatpush.msra.mxu0 0.0
  %1397 = vmatpush.msra.mxu0 0.0
  %1398 = vmatpush.msra.mxu0 %v1110
  %1399 = vmatpush.msra.mxu0 %v1109
  %1400 = vmatpush.msra.mxu0 %v1108
  %1401 = vmatpush.msra.mxu0 %v1107
  %1402 = vmatmul.f32.gmra.mxu0 %v1384
  %v1403 = vpop.f32.mrf.mxu0
  %v1404 = vadd.f32 %v1111, %v1403
  %1405 = vdwg.mxu0
  %1406 = vrot.lane.b32.xlu0 %v1351, 32
  %v1407 = vpop.permute.xlu0 %1406
  %1410 = vrot.lane.b32.xlu0 %v1373, 96
  %v1411 = vpop.permute.xlu0 %1410
  %1414 = vrot.lane.b32.xlu0 %v1404, 98
  %v1415 = vpop.permute.xlu0 %1414
  %v1417 = vsel %vm99, %v1382, %v1407
  %v1418 = vsel %vm1147, %v1417, %v1411
  %v1419 = vsel %vm1149, %v1418, %v1415
  %v1420 = vsel %vm1151, %v1419, 0.0
  %v1422 = vrot.slane %v1420, 7
  %v1424 = vsel %vm88, %v1152, %v1422
  %1425 = vst [vmem:[%s15] sm:$0x3] %v1424
  // Predicated region
  $region62: #{gat_embedding_forward.3} parent=0 // pred_check
    _
  $region63: #{gat_embedding_forward.3} parent=0 // pred_check_branch
    %1427 = sbr.rel (0) target = $region65
  $region64: #{gat_embedding_forward.3} parent=0 // pred_region
    _
  $region65: #{gat_embedding_forward.3} parent=0 // pred_fallthru
    _
  // Predicated region
  $region66: #{gat_embedding_forward.3} parent=0 // pred_check
    _
  $region67: #{gat_embedding_forward.3} parent=0 // pred_check_branch
    %1429 = sbr.rel (0) target = $region69
  $region68: #{gat_embedding_forward.3} parent=0 // pred_region
    _
  $region69: #{gat_embedding_forward.3} parent=0 // pred_fallthru
    _
  // Predicated region
  $region70: #{gat_embedding_forward.3} parent=0 // pred_check
    _
  $region71: #{gat_embedding_forward.3} parent=0 // pred_check_branch
    %1431 = sbr.rel (0) target = $region73
  $region72: #{gat_embedding_forward.3} parent=0 // pred_region
    _
  $region73: #{gat_embedding_forward.3} parent=0 // pred_fallthru
    _
  // Predicated region
  $region74: #{gat_embedding_forward.3} parent=0 // pred_check
    _
  $region75: #{gat_embedding_forward.3} parent=0 // pred_check_branch
    %1433 = sbr.rel (0) target = $region77
  $region76: #{gat_embedding_forward.3} parent=0 // pred_region
    _
  $region77: #{gat_embedding_forward.3} parent=0 // pred_fallthru
    _

</llo_original>
